<compile_context>
chip_gen: v6e
topology: v6e:2x2x1
jax: 0.10.0
libtpu: 0.0.40
codegen_flags: <defaults>
</compile_context>

<pallas_src>
import functools

import jax
import jax.numpy as jnp
from jax.experimental import pallas as pl
from jax.experimental.pallas import tpu as pltpu

RGB_MEAN = jnp.array([0.4488, 0.4371, 0.4040], jnp.float32)  # EDSR MeanShift, rgb_range=1, std=1


# ----------------------------------------------------------------------------
# Fused network kernel.
#   mean_ref : (Cin_pad, 1)          rgb mean (zero padded)
#   mask_ref : (9, H*W)              per-tap zero-padding validity masks
#   x_ref    : (1, Cin_pad, H*W)     one image, channels-on-sublane layout
#   w refs   : (Cout_i, 9*Cin_i)     gate-folded conv weights (conv0, blocks, out)
#   o_ref    : (1, num_colors, H*W)
#   xbuf     : (C_max, pad+H*W+pad)  VMEM halo scratch (flat spatial + zero strips)
# ----------------------------------------------------------------------------
def _edsr_fused_kernel(mean_ref, mask_ref, x_ref, *refs, W, pad):
    *w_refs, o_ref, xbuf = refs
    num_blocks = (len(w_refs) - 2) // 2
    num_colors = o_ref.shape[1]
    HW = x_ref.shape[2]

    masks = mask_ref[...]                           # (9, HW)
    # Zero the halo scratch once per image; conv stores only touch [pad, pad+HW).
    xbuf[...] = jnp.zeros(xbuf.shape, xbuf.dtype)

    def conv3x3(a, w_ref):
        """a: (Cin, HW) -> (Cout, HW).  One MXU matmul, K = 9*Cin."""
        cin = a.shape[0]
        # lane-aligned store of the activation into the middle of the halo buffer
        xbuf[:cin, pad:pad + HW] = a
        pieces = []
        tap = 0
        for dy in (-1, 0, 1):
            for dx in (-1, 0, 1):
                off = dy * W + dx
                shifted = xbuf[:cin, pad + off:pad + off + HW]   # static lane-offset slice
                # masks zero row-wrapped / out-of-image taps (== zero padding)
                pieces.append(shifted if off == 0 else shifted * masks[tap:tap + 1, :])
                tap += 1
        patches = jnp.concatenate(pieces, axis=0)   # (9*Cin, HW), spatial stays on lanes
        # TODO(synk): optional bf16 operands (f32 accumulate) for more MXU
        # throughput on v6e/v7x; kept f32 to match the PyTorch reference.
        return jnp.dot(w_ref[...], patches, preferred_element_type=jnp.float32)

    mean = mean_ref[...]                            # (Cin_pad, 1)
    x = x_ref[0] - mean                             # sub_mean
    feat = conv3x3(x, w_refs[0])                    # conv0 (gate folded into weights)
    res = feat
    for b in range(num_blocks):
        t = conv3x3(res, w_refs[1 + 2 * b])         # conv1 (gate folded)
        t = jnp.maximum(t, 0.0)                     # ReLU
        t = conv3x3(t, w_refs[2 + 2 * b])           # conv2 (gate * res_scale folded)
        res = res + t                               # residual add
    res = res + feat                                # global skip
    y = conv3x3(res, w_refs[-1])                    # output conv (tail gate folded on Cin)
    y = y + mean[:num_colors, :]                    # add_mean
    o_ref[0] = y.astype(o_ref.dtype)


# ----------------------------------------------------------------------------
# dnas gate surrogate (hoisted out of the kernel path; per-parameter only)
# ----------------------------------------------------------------------------
def dnas_gate(logits, tau):
    # TODO(synk): exact dnas.Conv2d Gumbel-softmax channel gating is not
    # reproducible without the dnas source; deterministic softmax surrogate
    # (noise=False, tau temperature) with keep-probability mask.
    prob = jax.nn.softmax(logits / tau)             # (Cout,)
    rmask = jnp.cumsum(prob[::-1])[::-1]            # P(channel i kept), in [0, 1]
    return rmask, prob


def conv_flops(H, W, cin, rmask):
    # TODO(synk): dnas flops formula unknown; expected-MAC proxy.
    return 2.0 * 9.0 * H * W * cin * jnp.sum(rmask)


# ----------------------------------------------------------------------------
# Wrapper helpers
# ----------------------------------------------------------------------------
def _prep_weight(w, out_scale=None, in_scale=None, cin_pad=None):
    """(3,3,Cin,Cout) HWIO -> (Cout, 9*Cin) with gate scales folded in."""
    w = w.astype(jnp.float32)
    if out_scale is not None:                       # weighted_feature on outputs
        w = w * out_scale                           # broadcast over Cout (last axis)
    if in_scale is not None:                        # weighted_feature on the conv input
        w = w * in_scale[None, None, :, None]
    cin = w.shape[2]
    if cin_pad is not None and cin_pad > cin:
        w = jnp.pad(w, ((0, 0), (0, 0), (0, cin_pad - cin), (0, 0)))
    kh, kw, cinp, cout = w.shape
    # tap-major, then cin  ->  (Cout, 9*Cin); matches the kernel's patch order
    return jnp.transpose(w.reshape(kh * kw, cinp, cout), (2, 0, 1)).reshape(cout, kh * kw * cinp)


def _make_tap_masks(H, W):
    yy = jnp.arange(H)[:, None]
    xx = jnp.arange(W)[None, :]
    ms = []
    for dy in (-1, 0, 1):
        for dx in (-1, 0, 1):
            valid = ((yy + dy >= 0) & (yy + dy < H) & (xx + dx >= 0) & (xx + dx < W))
            ms.append(valid.reshape(1, H * W))
    return jnp.concatenate(ms, axis=0).astype(jnp.float32)   # (9, H*W)


# ----------------------------------------------------------------------------
# Parameter init (deterministic, He-style)
# ----------------------------------------------------------------------------
def init_params(key, num_colors, channel_list, num_blocks):
    def conv_w(k, cin, cout):
        std = (2.0 / (9.0 * cin)) ** 0.5
        return std * jax.random.normal(k, (3, 3, cin, cout), jnp.float32)

    keys = jax.random.split(key, 2 + 4 * num_blocks + 2)
    ki = iter(keys)
    params = {
        "w0": conv_w(next(ki), num_colors, channel_list[0]),
        "gate0": 0.1 * jax.random.normal(next(ki), (channel_list[0],), jnp.float32),
        "blocks": [],
    }
    in_plane = channel_list[0]
    for i in range(num_blocks):
        mid, out = channel_list[i + 1]
        assert out == in_plane
        params["blocks"].append({
            "w1": conv_w(next(ki), in_plane, mid),
            "gate1": 0.1 * jax.random.normal(next(ki), (mid,), jnp.float32),
            "w2": conv_w(next(ki), mid, in_plane),
            "gate2": 0.1 * jax.random.normal(next(ki), (in_plane,), jnp.float32),
        })
        in_plane = out
    params["w_out"] = conv_w(next(ki), in_plane, num_colors)
    return params


# ----------------------------------------------------------------------------
# EDSRGated forward (scale=1 -> Upsampler is identity; res_scale=0.1)
# ----------------------------------------------------------------------------
def edsr_gated_forward(params, x_nchw, tau=1.0, res_scale=0.1):
    N, C, H, W = x_nchw.shape
    assert C == RGB_MEAN.shape[0]
    HW = H * W
    cin_pad = max(8, ((C + 7) // 8) * 8)

    # ---- hoisted, per-parameter gate math + weight folding (tiny XLA ops) ----
    rmask0, prob0 = dnas_gate(params["gate0"], tau)
    prob_list = [prob0]
    flops_list = [conv_flops(H, W, C, rmask0)]
    w_list = [_prep_weight(params["w0"], out_scale=rmask0, cin_pad=cin_pad)]
    rmask_last = rmask0
    for blk in params["blocks"]:
        r1, p1 = dnas_gate(blk["gate1"], tau)
        r2, _p2 = dnas_gate(blk["gate2"], tau)
        w_list.append(_prep_weight(blk["w1"], out_scale=r1))                # gate folded
        w_list.append(_prep_weight(blk["w2"], out_scale=r2 * res_scale))    # gate * res_scale folded
        flops_list += [conv_flops(H, W, blk["w1"].shape[2], r1),
                       conv_flops(H, W, blk["w2"].shape[2], r2)]
        prob_list += [p1, prob0]    # reference block appends the incoming reuse prob (conv0's)
        rmask_last = r2
    # tail: Upsampler(scale=1) is identity; weighted_feature(tail(res), rmask_last)
    # is a per-input-channel scale -> folded into the output conv weights.
    w_list.append(_prep_weight(params["w_out"], in_scale=rmask_last))

    # internal channel counts must be multiples of the f32 sublane tile (8)
    assert all((w.shape[1] // 9) % 8 == 0 for w in w_list)

    # ---- kernel inputs (NCHW -> (N, C, H*W) is a free reshape, no transpose) ----
    mean = jnp.zeros((cin_pad, 1), jnp.float32).at[:C, :].set(RGB_MEAN.reshape(C, 1))
    masks = _make_tap_masks(H, W)
    x = x_nchw.astype(jnp.float32).reshape(N, C, HW)
    if cin_pad > C:
        x = jnp.pad(x, ((0, 0), (0, cin_pad - C), (0, 0)))

    c_buf = max(cin_pad, max(w.shape[0] for w in w_list[:-1]))
    PAD = 128   # lane-aligned halo offset; needs only >= W+1

    # TODO(synk): for production-size H, W, C add a row-tiled "parallel" spatial
    # grid axis with a 1-row halo and size tiles against v7x's 64 MiB VMEM.
    kernel = functools.partial(_edsr_fused_kernel, W=W, pad=PAD)
    in_specs = ([pl.BlockSpec((cin_pad, 1), lambda n: (0, 0)),
                 pl.BlockSpec((9, HW), lambda n: (0, 0)),
                 pl.BlockSpec((1, cin_pad, HW), lambda n: (n, 0, 0))]
                + [pl.BlockSpec(w.shape, lambda n: (0, 0)) for w in w_list])

    y_flat = pl.pallas_call(
        kernel,
        out_shape=jax.ShapeDtypeStruct((N, C, HW), jnp.float32),
        grid=(N,),
        in_specs=in_specs,
        out_specs=pl.BlockSpec((1, C, HW), lambda n: (n, 0, 0)),
        scratch_shapes=[pltpu.VMEM((c_buf, PAD + HW + PAD), jnp.float32)],
        compiler_params=pltpu.CompilerParams(dimension_semantics=("parallel",)),
    )(mean, masks, x, *w_list)

    y = y_flat.reshape(N, C, H, W)
    total_flops = jnp.sum(jnp.stack(flops_list))
    return y, prob_list, total_flops, flops_list


# ----------------------------------------------------------------------------
# Plain-JAX reference of the same math (for an in-script numerical check)
# ----------------------------------------------------------------------------
def _ref_forward(params, x_nchw, tau=1.0, res_scale=0.1):
    mean = RGB_MEAN.reshape(1, -1, 1, 1)

    def conv(x, w):
        return jax.lax.conv_general_dilated(
            x, w, window_strides=(1, 1), padding="SAME",
            dimension_numbers=("NCHW", "HWIO", "NCHW"),
            precision=jax.lax.Precision.HIGHEST)

    x = x_nchw.astype(jnp.float32) - mean
    r0, _ = dnas_gate(params["gate0"], tau)
    feat = conv(x, params["w0"]) * r0[None, :, None, None]
    res = feat
    r_last = r0
    for blk in params["blocks"]:
        r1, _ = dnas_gate(blk["gate1"], tau)
        r2, _ = dnas_gate(blk["gate2"], tau)
        t = jnp.maximum(conv(res, blk["w1"]) * r1[None, :, None, None], 0.0)
        t = conv(t, blk["w2"]) * r2[None, :, None, None]
        res = t * res_scale + res
        r_last = r2
    res = res + feat
    res = res * r_last[None, :, None, None]
    return conv(res, params["w_out"]) + mean


if __name__ == "__main__":
    key = jax.random.PRNGKey(0)
    kx, kp = jax.random.split(key)

    num_blocks = 2
    num_colors = 3
    channel_list = [8, (8, 8), (8, 8)]
    N, H, W = 2, 16, 16

    params = init_params(kp, num_colors, channel_list, num_blocks)
    x = jax.random.normal(kx, (N, num_colors, H, W), jnp.float32)

    fwd = jax.jit(edsr_gated_forward)
    y, prob_list, total_flops, flops_list = fwd(params, x)
    jax.block_until_ready(y)
    jax.block_until_ready(total_flops)
    assert y.shape == (N, num_colors, H, W)

    # correctness check against the plain-JAX reference of the same math
    y_ref = _ref_forward(params, x, tau=1.0, res_scale=0.1)
    rel = jnp.linalg.norm(y - y_ref) / (jnp.linalg.norm(y_ref) + 1e-12)
    assert float(rel) < 5e-2, f"kernel/reference mismatch: rel={float(rel):.3e}"

    print("KERNEL_OK")
</pallas_src>

<mosaic_0001>
module attributes {stable_mosaic.version = 11 : i64} {
  func.func @_edsr_fused_kernel(%arg0: i32, %arg1: memref<8x1xf32, #tpu.memory_space<vmem>>, %arg2: memref<9x256xf32, #tpu.memory_space<vmem>>, %arg3: memref<1x8x256xf32, #tpu.memory_space<vmem>>, %arg4: memref<8x72xf32, #tpu.memory_space<vmem>>, %arg5: memref<8x72xf32, #tpu.memory_space<vmem>>, %arg6: memref<8x72xf32, #tpu.memory_space<vmem>>, %arg7: memref<8x72xf32, #tpu.memory_space<vmem>>, %arg8: memref<8x72xf32, #tpu.memory_space<vmem>>, %arg9: memref<3x72xf32, #tpu.memory_space<vmem>>, %arg10: memref<1x3x256xf32, #tpu.memory_space<vmem>>, %arg11: memref<8x512xf32, #tpu.memory_space<vmem>>) attributes {dimension_semantics = [#tpu.dimension_semantics<parallel>], iteration_bounds = array<i64: 2>, scalar_prefetch = 0 : i64, scratch_operands = 1 : i64, tpu.core_type = #tpu.core_type<tc>, window_params = [{pipeline_mode = #tpu.pipeline_mode<synchronous>, transform_indices = @transform_0, window_bounds = array<i64: 8, 1>}, {pipeline_mode = #tpu.pipeline_mode<synchronous>, transform_indices = @transform_1, window_bounds = array<i64: 9, 256>}, {transform_indices = @transform_2, window_bounds = array<i64: 1, 8, 256>}, {pipeline_mode = #tpu.pipeline_mode<synchronous>, transform_indices = @transform_3, window_bounds = array<i64: 8, 72>}, {pipeline_mode = #tpu.pipeline_mode<synchronous>, transform_indices = @transform_4, window_bounds = array<i64: 8, 72>}, {pipeline_mode = #tpu.pipeline_mode<synchronous>, transform_indices = @transform_5, window_bounds = array<i64: 8, 72>}, {pipeline_mode = #tpu.pipeline_mode<synchronous>, transform_indices = @transform_6, window_bounds = array<i64: 8, 72>}, {pipeline_mode = #tpu.pipeline_mode<synchronous>, transform_indices = @transform_7, window_bounds = array<i64: 8, 72>}, {pipeline_mode = #tpu.pipeline_mode<synchronous>, transform_indices = @transform_8, window_bounds = array<i64: 3, 72>}, {transform_indices = @transform_9, window_bounds = array<i64: 1, 3, 256>}]} {
    %c0 = arith.constant 0 : index
    %c0_0 = arith.constant 0 : index
    %0 = vector.load %arg2[%c0, %c0_0] : memref<9x256xf32, #tpu.memory_space<vmem>>, vector<9x256xf32>
    %cst = arith.constant 0.000000e+00 : f32
    %1 = vector.broadcast %cst : f32 to vector<8x512xf32>
    %c0_1 = arith.constant 0 : index
    %c0_2 = arith.constant 0 : index
    %2 = vector.load %arg11[%c0_1, %c0_2] : memref<8x512xf32, #tpu.memory_space<vmem>>, vector<8x512xf32>
    tpu.vector_store %arg11[%c0_1, %c0_2], %1 {strides = array<i32>} : memref<8x512xf32, #tpu.memory_space<vmem>>, vector<8x512xf32>,
    %c0_3 = arith.constant 0 : index
    %c0_4 = arith.constant 0 : index
    %3 = vector.load %arg1[%c0_3, %c0_4] : memref<8x1xf32, #tpu.memory_space<vmem>>, vector<8x1xf32>
    %c0_5 = arith.constant 0 : index
    %c0_6 = arith.constant 0 : index
    %c0_7 = arith.constant 0 : index
    %4 = vector.load %arg3[%c0_5, %c0_6, %c0_7] : memref<1x8x256xf32, #tpu.memory_space<vmem>>, vector<1x8x256xf32>
    %5 = vector.shape_cast %4 : vector<1x8x256xf32> to vector<8x256xf32>
    %6 = vector.broadcast %3 : vector<8x1xf32> to vector<8x256xf32>
    %7 = arith.subf %5, %6 : vector<8x256xf32>
    %c0_8 = arith.constant 0 : index
    %c128 = arith.constant 128 : index
    %8 = vector.load %arg11[%c0_8, %c128] : memref<8x512xf32, #tpu.memory_space<vmem>>, vector<8x256xf32>
    tpu.vector_store %arg11[%c0_8, %c128], %7 {strides = array<i32>} : memref<8x512xf32, #tpu.memory_space<vmem>>, vector<8x256xf32>,
    %c0_9 = arith.constant 0 : index
    %c111 = arith.constant 111 : index
    %9 = vector.load %arg11[%c0_9, %c111] : memref<8x512xf32, #tpu.memory_space<vmem>>, vector<8x256xf32>
    %10 = vector.extract_strided_slice %0 {offsets = [0, 0], sizes = [1, 256], strides = [1, 1]} : vector<9x256xf32> to vector<1x256xf32>
    %11 = vector.broadcast %10 : vector<1x256xf32> to vector<8x256xf32>
    %12 = arith.mulf %9, %11 : vector<8x256xf32>
    %c0_10 = arith.constant 0 : index
    %c112 = arith.constant 112 : index
    %13 = vector.load %arg11[%c0_10, %c112] : memref<8x512xf32, #tpu.memory_space<vmem>>, vector<8x256xf32>
    %14 = vector.extract_strided_slice %0 {offsets = [1, 0], sizes = [1, 256], strides = [1, 1]} : vector<9x256xf32> to vector<1x256xf32>
    %15 = vector.broadcast %14 : vector<1x256xf32> to vector<8x256xf32>
    %16 = arith.mulf %13, %15 : vector<8x256xf32>
    %c0_11 = arith.constant 0 : index
    %c113 = arith.constant 113 : index
    %17 = vector.load %arg11[%c0_11, %c113] : memref<8x512xf32, #tpu.memory_space<vmem>>, vector<8x256xf32>
    %18 = vector.extract_strided_slice %0 {offsets = [2, 0], sizes = [1, 256], strides = [1, 1]} : vector<9x256xf32> to vector<1x256xf32>
    %19 = vector.broadcast %18 : vector<1x256xf32> to vector<8x256xf32>
    %20 = arith.mulf %17, %19 : vector<8x256xf32>
    %c0_12 = arith.constant 0 : index
    %c127 = arith.constant 127 : index
    %21 = vector.load %arg11[%c0_12, %c127] : memref<8x512xf32, #tpu.memory_space<vmem>>, vector<8x256xf32>
    %22 = vector.extract_strided_slice %0 {offsets = [3, 0], sizes = [1, 256], strides = [1, 1]} : vector<9x256xf32> to vector<1x256xf32>
    %23 = vector.broadcast %22 : vector<1x256xf32> to vector<8x256xf32>
    %24 = arith.mulf %21, %23 : vector<8x256xf32>
    %c0_13 = arith.constant 0 : index
    %c128_14 = arith.constant 128 : index
    %25 = vector.load %arg11[%c0_13, %c128_14] : memref<8x512xf32, #tpu.memory_space<vmem>>, vector<8x256xf32>
    %c0_15 = arith.constant 0 : index
    %c129 = arith.constant 129 : index
    %26 = vector.load %arg11[%c0_15, %c129] : memref<8x512xf32, #tpu.memory_space<vmem>>, vector<8x256xf32>
    %27 = vector.extract_strided_slice %0 {offsets = [5, 0], sizes = [1, 256], strides = [1, 1]} : vector<9x256xf32> to vector<1x256xf32>
    %28 = vector.broadcast %27 : vector<1x256xf32> to vector<8x256xf32>
    %29 = arith.mulf %26, %28 : vector<8x256xf32>
    %c0_16 = arith.constant 0 : index
    %c143 = arith.constant 143 : index
    %30 = vector.load %arg11[%c0_16, %c143] : memref<8x512xf32, #tpu.memory_space<vmem>>, vector<8x256xf32>
    %31 = vector.extract_strided_slice %0 {offsets = [6, 0], sizes = [1, 256], strides = [1, 1]} : vector<9x256xf32> to vector<1x256xf32>
    %32 = vector.broadcast %31 : vector<1x256xf32> to vector<8x256xf32>
    %33 = arith.mulf %30, %32 : vector<8x256xf32>
    %c0_17 = arith.constant 0 : index
    %c144 = arith.constant 144 : index
    %34 = vector.load %arg11[%c0_17, %c144] : memref<8x512xf32, #tpu.memory_space<vmem>>, vector<8x256xf32>
    %35 = vector.extract_strided_slice %0 {offsets = [7, 0], sizes = [1, 256], strides = [1, 1]} : vector<9x256xf32> to vector<1x256xf32>
    %36 = vector.broadcast %35 : vector<1x256xf32> to vector<8x256xf32>
    %37 = arith.mulf %34, %36 : vector<8x256xf32>
    %c0_18 = arith.constant 0 : index
    %c145 = arith.constant 145 : index
    %38 = vector.load %arg11[%c0_18, %c145] : memref<8x512xf32, #tpu.memory_space<vmem>>, vector<8x256xf32>
    %39 = vector.extract_strided_slice %0 {offsets = [8, 0], sizes = [1, 256], strides = [1, 1]} : vector<9x256xf32> to vector<1x256xf32>
    %40 = vector.broadcast %39 : vector<1x256xf32> to vector<8x256xf32>
    %41 = arith.mulf %38, %40 : vector<8x256xf32>
    %42 = tpu.concatenate %12, %16, %20, %24, %25, %29, %33, %37, %41 in 0 : vector<8x256xf32>, vector<8x256xf32>, vector<8x256xf32>, vector<8x256xf32>, vector<8x256xf32>, vector<8x256xf32>, vector<8x256xf32>, vector<8x256xf32>, vector<8x256xf32> -> vector<72x256xf32>
    %c0_19 = arith.constant 0 : index
    %c0_20 = arith.constant 0 : index
    %43 = vector.load %arg4[%c0_19, %c0_20] : memref<8x72xf32, #tpu.memory_space<vmem>>, vector<8x72xf32>
    %cst_21 = arith.constant dense<0.000000e+00> : vector<8x256xf32>
    %44 = tpu.matmul %43, %42, %cst_21 {dimension_numbers = #tpu.dot_dimension_numbers<[1], [0], [0], [1], [0, 0, 1, 1], [], []>} : vector<8x72xf32>, vector<72x256xf32>, vector<8x256xf32> -> vector<8x256xf32>
    %c0_22 = arith.constant 0 : index
    %c128_23 = arith.constant 128 : index
    %45 = vector.load %arg11[%c0_22, %c128_23] : memref<8x512xf32, #tpu.memory_space<vmem>>, vector<8x256xf32>
    tpu.vector_store %arg11[%c0_22, %c128_23], %44 {strides = array<i32>} : memref<8x512xf32, #tpu.memory_space<vmem>>, vector<8x256xf32>,
    %c0_24 = arith.constant 0 : index
    %c111_25 = arith.constant 111 : index
    %46 = vector.load %arg11[%c0_24, %c111_25] : memref<8x512xf32, #tpu.memory_space<vmem>>, vector<8x256xf32>
    %47 = vector.extract_strided_slice %0 {offsets = [0, 0], sizes = [1, 256], strides = [1, 1]} : vector<9x256xf32> to vector<1x256xf32>
    %48 = vector.broadcast %47 : vector<1x256xf32> to vector<8x256xf32>
    %49 = arith.mulf %46, %48 : vector<8x256xf32>
    %c0_26 = arith.constant 0 : index
    %c112_27 = arith.constant 112 : index
    %50 = vector.load %arg11[%c0_26, %c112_27] : memref<8x512xf32, #tpu.memory_space<vmem>>, vector<8x256xf32>
    %51 = vector.extract_strided_slice %0 {offsets = [1, 0], sizes = [1, 256], strides = [1, 1]} : vector<9x256xf32> to vector<1x256xf32>
    %52 = vector.broadcast %51 : vector<1x256xf32> to vector<8x256xf32>
    %53 = arith.mulf %50, %52 : vector<8x256xf32>
    %c0_28 = arith.constant 0 : index
    %c113_29 = arith.constant 113 : index
    %54 = vector.load %arg11[%c0_28, %c113_29] : memref<8x512xf32, #tpu.memory_space<vmem>>, vector<8x256xf32>
    %55 = vector.extract_strided_slice %0 {offsets = [2, 0], sizes = [1, 256], strides = [1, 1]} : vector<9x256xf32> to vector<1x256xf32>
    %56 = vector.broadcast %55 : vector<1x256xf32> to vector<8x256xf32>
    %57 = arith.mulf %54, %56 : vector<8x256xf32>
    %c0_30 = arith.constant 0 : index
    %c127_31 = arith.constant 127 : index
    %58 = vector.load %arg11[%c0_30, %c127_31] : memref<8x512xf32, #tpu.memory_space<vmem>>, vector<8x256xf32>
    %59 = vector.extract_strided_slice %0 {offsets = [3, 0], sizes = [1, 256], strides = [1, 1]} : vector<9x256xf32> to vector<1x256xf32>
    %60 = vector.broadcast %59 : vector<1x256xf32> to vector<8x256xf32>
    %61 = arith.mulf %58, %60 : vector<8x256xf32>
    %c0_32 = arith.constant 0 : index
    %c128_33 = arith.constant 128 : index
    %62 = vector.load %arg11[%c0_32, %c128_33] : memref<8x512xf32, #tpu.memory_space<vmem>>, vector<8x256xf32>
    %c0_34 = arith.constant 0 : index
    %c129_35 = arith.constant 129 : index
    %63 = vector.load %arg11[%c0_34, %c129_35] : memref<8x512xf32, #tpu.memory_space<vmem>>, vector<8x256xf32>
    %64 = vector.extract_strided_slice %0 {offsets = [5, 0], sizes = [1, 256], strides = [1, 1]} : vector<9x256xf32> to vector<1x256xf32>
    %65 = vector.broadcast %64 : vector<1x256xf32> to vector<8x256xf32>
    %66 = arith.mulf %63, %65 : vector<8x256xf32>
    %c0_36 = arith.constant 0 : index
    %c143_37 = arith.constant 143 : index
    %67 = vector.load %arg11[%c0_36, %c143_37] : memref<8x512xf32, #tpu.memory_space<vmem>>, vector<8x256xf32>
    %68 = vector.extract_strided_slice %0 {offsets = [6, 0], sizes = [1, 256], strides = [1, 1]} : vector<9x256xf32> to vector<1x256xf32>
    %69 = vector.broadcast %68 : vector<1x256xf32> to vector<8x256xf32>
    %70 = arith.mulf %67, %69 : vector<8x256xf32>
    %c0_38 = arith.constant 0 : index
    %c144_39 = arith.constant 144 : index
    %71 = vector.load %arg11[%c0_38, %c144_39] : memref<8x512xf32, #tpu.memory_space<vmem>>, vector<8x256xf32>
    %72 = vector.extract_strided_slice %0 {offsets = [7, 0], sizes = [1, 256], strides = [1, 1]} : vector<9x256xf32> to vector<1x256xf32>
    %73 = vector.broadcast %72 : vector<1x256xf32> to vector<8x256xf32>
    %74 = arith.mulf %71, %73 : vector<8x256xf32>
    %c0_40 = arith.constant 0 : index
    %c145_41 = arith.constant 145 : index
    %75 = vector.load %arg11[%c0_40, %c145_41] : memref<8x512xf32, #tpu.memory_space<vmem>>, vector<8x256xf32>
    %76 = vector.extract_strided_slice %0 {offsets = [8, 0], sizes = [1, 256], strides = [1, 1]} : vector<9x256xf32> to vector<1x256xf32>
    %77 = vector.broadcast %76 : vector<1x256xf32> to vector<8x256xf32>
    %78 = arith.mulf %75, %77 : vector<8x256xf32>
    %79 = tpu.concatenate %49, %53, %57, %61, %62, %66, %70, %74, %78 in 0 : vector<8x256xf32>, vector<8x256xf32>, vector<8x256xf32>, vector<8x256xf32>, vector<8x256xf32>, vector<8x256xf32>, vector<8x256xf32>, vector<8x256xf32>, vector<8x256xf32> -> vector<72x256xf32>
    %c0_42 = arith.constant 0 : index
    %c0_43 = arith.constant 0 : index
    %80 = vector.load %arg5[%c0_42, %c0_43] : memref<8x72xf32, #tpu.memory_space<vmem>>, vector<8x72xf32>
    %cst_44 = arith.constant dense<0.000000e+00> : vector<8x256xf32>
    %81 = tpu.matmul %80, %79, %cst_44 {dimension_numbers = #tpu.dot_dimension_numbers<[1], [0], [0], [1], [0, 0, 1, 1], [], []>} : vector<8x72xf32>, vector<72x256xf32>, vector<8x256xf32> -> vector<8x256xf32>
    %cst_45 = arith.constant 0.000000e+00 : f32
    %82 = vector.broadcast %cst_45 : f32 to vector<8x256xf32>
    %83 = arith.maximumf %81, %82 : vector<8x256xf32>
    %c0_46 = arith.constant 0 : index
    %c128_47 = arith.constant 128 : index
    %84 = vector.load %arg11[%c0_46, %c128_47] : memref<8x512xf32, #tpu.memory_space<vmem>>, vector<8x256xf32>
    tpu.vector_store %arg11[%c0_46, %c128_47], %83 {strides = array<i32>} : memref<8x512xf32, #tpu.memory_space<vmem>>, vector<8x256xf32>,
    %c0_48 = arith.constant 0 : index
    %c111_49 = arith.constant 111 : index
    %85 = vector.load %arg11[%c0_48, %c111_49] : memref<8x512xf32, #tpu.memory_space<vmem>>, vector<8x256xf32>
    %86 = vector.extract_strided_slice %0 {offsets = [0, 0], sizes = [1, 256], strides = [1, 1]} : vector<9x256xf32> to vector<1x256xf32>
    %87 = vector.broadcast %86 : vector<1x256xf32> to vector<8x256xf32>
    %88 = arith.mulf %85, %87 : vector<8x256xf32>
    %c0_50 = arith.constant 0 : index
    %c112_51 = arith.constant 112 : index
    %89 = vector.load %arg11[%c0_50, %c112_51] : memref<8x512xf32, #tpu.memory_space<vmem>>, vector<8x256xf32>
    %90 = vector.extract_strided_slice %0 {offsets = [1, 0], sizes = [1, 256], strides = [1, 1]} : vector<9x256xf32> to vector<1x256xf32>
    %91 = vector.broadcast %90 : vector<1x256xf32> to vector<8x256xf32>
    %92 = arith.mulf %89, %91 : vector<8x256xf32>
    %c0_52 = arith.constant 0 : index
    %c113_53 = arith.constant 113 : index
    %93 = vector.load %arg11[%c0_52, %c113_53] : memref<8x512xf32, #tpu.memory_space<vmem>>, vector<8x256xf32>
    %94 = vector.extract_strided_slice %0 {offsets = [2, 0], sizes = [1, 256], strides = [1, 1]} : vector<9x256xf32> to vector<1x256xf32>
    %95 = vector.broadcast %94 : vector<1x256xf32> to vector<8x256xf32>
    %96 = arith.mulf %93, %95 : vector<8x256xf32>
    %c0_54 = arith.constant 0 : index
    %c127_55 = arith.constant 127 : index
    %97 = vector.load %arg11[%c0_54, %c127_55] : memref<8x512xf32, #tpu.memory_space<vmem>>, vector<8x256xf32>
    %98 = vector.extract_strided_slice %0 {offsets = [3, 0], sizes = [1, 256], strides = [1, 1]} : vector<9x256xf32> to vector<1x256xf32>
    %99 = vector.broadcast %98 : vector<1x256xf32> to vector<8x256xf32>
    %100 = arith.mulf %97, %99 : vector<8x256xf32>
    %c0_56 = arith.constant 0 : index
    %c128_57 = arith.constant 128 : index
    %101 = vector.load %arg11[%c0_56, %c128_57] : memref<8x512xf32, #tpu.memory_space<vmem>>, vector<8x256xf32>
    %c0_58 = arith.constant 0 : index
    %c129_59 = arith.constant 129 : index
    %102 = vector.load %arg11[%c0_58, %c129_59] : memref<8x512xf32, #tpu.memory_space<vmem>>, vector<8x256xf32>
    %103 = vector.extract_strided_slice %0 {offsets = [5, 0], sizes = [1, 256], strides = [1, 1]} : vector<9x256xf32> to vector<1x256xf32>
    %104 = vector.broadcast %103 : vector<1x256xf32> to vector<8x256xf32>
    %105 = arith.mulf %102, %104 : vector<8x256xf32>
    %c0_60 = arith.constant 0 : index
    %c143_61 = arith.constant 143 : index
    %106 = vector.load %arg11[%c0_60, %c143_61] : memref<8x512xf32, #tpu.memory_space<vmem>>, vector<8x256xf32>
    %107 = vector.extract_strided_slice %0 {offsets = [6, 0], sizes = [1, 256], strides = [1, 1]} : vector<9x256xf32> to vector<1x256xf32>
    %108 = vector.broadcast %107 : vector<1x256xf32> to vector<8x256xf32>
    %109 = arith.mulf %106, %108 : vector<8x256xf32>
    %c0_62 = arith.constant 0 : index
    %c144_63 = arith.constant 144 : index
    %110 = vector.load %arg11[%c0_62, %c144_63] : memref<8x512xf32, #tpu.memory_space<vmem>>, vector<8x256xf32>
    %111 = vector.extract_strided_slice %0 {offsets = [7, 0], sizes = [1, 256], strides = [1, 1]} : vector<9x256xf32> to vector<1x256xf32>
    %112 = vector.broadcast %111 : vector<1x256xf32> to vector<8x256xf32>
    %113 = arith.mulf %110, %112 : vector<8x256xf32>
    %c0_64 = arith.constant 0 : index
    %c145_65 = arith.constant 145 : index
    %114 = vector.load %arg11[%c0_64, %c145_65] : memref<8x512xf32, #tpu.memory_space<vmem>>, vector<8x256xf32>
    %115 = vector.extract_strided_slice %0 {offsets = [8, 0], sizes = [1, 256], strides = [1, 1]} : vector<9x256xf32> to vector<1x256xf32>
    %116 = vector.broadcast %115 : vector<1x256xf32> to vector<8x256xf32>
    %117 = arith.mulf %114, %116 : vector<8x256xf32>
    %118 = tpu.concatenate %88, %92, %96, %100, %101, %105, %109, %113, %117 in 0 : vector<8x256xf32>, vector<8x256xf32>, vector<8x256xf32>, vector<8x256xf32>, vector<8x256xf32>, vector<8x256xf32>, vector<8x256xf32>, vector<8x256xf32>, vector<8x256xf32> -> vector<72x256xf32>
    %c0_66 = arith.constant 0 : index
    %c0_67 = arith.constant 0 : index
    %119 = vector.load %arg6[%c0_66, %c0_67] : memref<8x72xf32, #tpu.memory_space<vmem>>, vector<8x72xf32>
    %cst_68 = arith.constant dense<0.000000e+00> : vector<8x256xf32>
    %120 = tpu.matmul %119, %118, %cst_68 {dimension_numbers = #tpu.dot_dimension_numbers<[1], [0], [0], [1], [0, 0, 1, 1], [], []>} : vector<8x72xf32>, vector<72x256xf32>, vector<8x256xf32> -> vector<8x256xf32>
    %121 = arith.addf %44, %120 : vector<8x256xf32>
    %c0_69 = arith.constant 0 : index
    %c128_70 = arith.constant 128 : index
    %122 = vector.load %arg11[%c0_69, %c128_70] : memref<8x512xf32, #tpu.memory_space<vmem>>, vector<8x256xf32>
    tpu.vector_store %arg11[%c0_69, %c128_70], %121 {strides = array<i32>} : memref<8x512xf32, #tpu.memory_space<vmem>>, vector<8x256xf32>,
    %c0_71 = arith.constant 0 : index
    %c111_72 = arith.constant 111 : index
    %123 = vector.load %arg11[%c0_71, %c111_72] : memref<8x512xf32, #tpu.memory_space<vmem>>, vector<8x256xf32>
    %124 = vector.extract_strided_slice %0 {offsets = [0, 0], sizes = [1, 256], strides = [1, 1]} : vector<9x256xf32> to vector<1x256xf32>
    %125 = vector.broadcast %124 : vector<1x256xf32> to vector<8x256xf32>
    %126 = arith.mulf %123, %125 : vector<8x256xf32>
    %c0_73 = arith.constant 0 : index
    %c112_74 = arith.constant 112 : index
    %127 = vector.load %arg11[%c0_73, %c112_74] : memref<8x512xf32, #tpu.memory_space<vmem>>, vector<8x256xf32>
    %128 = vector.extract_strided_slice %0 {offsets = [1, 0], sizes = [1, 256], strides = [1, 1]} : vector<9x256xf32> to vector<1x256xf32>
    %129 = vector.broadcast %128 : vector<1x256xf32> to vector<8x256xf32>
    %130 = arith.mulf %127, %129 : vector<8x256xf32>
    %c0_75 = arith.constant 0 : index
    %c113_76 = arith.constant 113 : index
    %131 = vector.load %arg11[%c0_75, %c113_76] : memref<8x512xf32, #tpu.memory_space<vmem>>, vector<8x256xf32>
    %132 = vector.extract_strided_slice %0 {offsets = [2, 0], sizes = [1, 256], strides = [1, 1]} : vector<9x256xf32> to vector<1x256xf32>
    %133 = vector.broadcast %132 : vector<1x256xf32> to vector<8x256xf32>
    %134 = arith.mulf %131, %133 : vector<8x256xf32>
    %c0_77 = arith.constant 0 : index
    %c127_78 = arith.constant 127 : index
    %135 = vector.load %arg11[%c0_77, %c127_78] : memref<8x512xf32, #tpu.memory_space<vmem>>, vector<8x256xf32>
    %136 = vector.extract_strided_slice %0 {offsets = [3, 0], sizes = [1, 256], strides = [1, 1]} : vector<9x256xf32> to vector<1x256xf32>
    %137 = vector.broadcast %136 : vector<1x256xf32> to vector<8x256xf32>
    %138 = arith.mulf %135, %137 : vector<8x256xf32>
    %c0_79 = arith.constant 0 : index
    %c128_80 = arith.constant 128 : index
    %139 = vector.load %arg11[%c0_79, %c128_80] : memref<8x512xf32, #tpu.memory_space<vmem>>, vector<8x256xf32>
    %c0_81 = arith.constant 0 : index
    %c129_82 = arith.constant 129 : index
    %140 = vector.load %arg11[%c0_81, %c129_82] : memref<8x512xf32, #tpu.memory_space<vmem>>, vector<8x256xf32>
    %141 = vector.extract_strided_slice %0 {offsets = [5, 0], sizes = [1, 256], strides = [1, 1]} : vector<9x256xf32> to vector<1x256xf32>
    %142 = vector.broadcast %141 : vector<1x256xf32> to vector<8x256xf32>
    %143 = arith.mulf %140, %142 : vector<8x256xf32>
    %c0_83 = arith.constant 0 : index
    %c143_84 = arith.constant 143 : index
    %144 = vector.load %arg11[%c0_83, %c143_84] : memref<8x512xf32, #tpu.memory_space<vmem>>, vector<8x256xf32>
    %145 = vector.extract_strided_slice %0 {offsets = [6, 0], sizes = [1, 256], strides = [1, 1]} : vector<9x256xf32> to vector<1x256xf32>
    %146 = vector.broadcast %145 : vector<1x256xf32> to vector<8x256xf32>
    %147 = arith.mulf %144, %146 : vector<8x256xf32>
    %c0_85 = arith.constant 0 : index
    %c144_86 = arith.constant 144 : index
    %148 = vector.load %arg11[%c0_85, %c144_86] : memref<8x512xf32, #tpu.memory_space<vmem>>, vector<8x256xf32>
    %149 = vector.extract_strided_slice %0 {offsets = [7, 0], sizes = [1, 256], strides = [1, 1]} : vector<9x256xf32> to vector<1x256xf32>
    %150 = vector.broadcast %149 : vector<1x256xf32> to vector<8x256xf32>
    %151 = arith.mulf %148, %150 : vector<8x256xf32>
    %c0_87 = arith.constant 0 : index
    %c145_88 = arith.constant 145 : index
    %152 = vector.load %arg11[%c0_87, %c145_88] : memref<8x512xf32, #tpu.memory_space<vmem>>, vector<8x256xf32>
    %153 = vector.extract_strided_slice %0 {offsets = [8, 0], sizes = [1, 256], strides = [1, 1]} : vector<9x256xf32> to vector<1x256xf32>
    %154 = vector.broadcast %153 : vector<1x256xf32> to vector<8x256xf32>
    %155 = arith.mulf %152, %154 : vector<8x256xf32>
    %156 = tpu.concatenate %126, %130, %134, %138, %139, %143, %147, %151, %155 in 0 : vector<8x256xf32>, vector<8x256xf32>, vector<8x256xf32>, vector<8x256xf32>, vector<8x256xf32>, vector<8x256xf32>, vector<8x256xf32>, vector<8x256xf32>, vector<8x256xf32> -> vector<72x256xf32>
    %c0_89 = arith.constant 0 : index
    %c0_90 = arith.constant 0 : index
    %157 = vector.load %arg7[%c0_89, %c0_90] : memref<8x72xf32, #tpu.memory_space<vmem>>, vector<8x72xf32>
    %cst_91 = arith.constant dense<0.000000e+00> : vector<8x256xf32>
    %158 = tpu.matmul %157, %156, %cst_91 {dimension_numbers = #tpu.dot_dimension_numbers<[1], [0], [0], [1], [0, 0, 1, 1], [], []>} : vector<8x72xf32>, vector<72x256xf32>, vector<8x256xf32> -> vector<8x256xf32>
    %cst_92 = arith.constant 0.000000e+00 : f32
    %159 = vector.broadcast %cst_92 : f32 to vector<8x256xf32>
    %160 = arith.maximumf %158, %159 : vector<8x256xf32>
    %c0_93 = arith.constant 0 : index
    %c128_94 = arith.constant 128 : index
    %161 = vector.load %arg11[%c0_93, %c128_94] : memref<8x512xf32, #tpu.memory_space<vmem>>, vector<8x256xf32>
    tpu.vector_store %arg11[%c0_93, %c128_94], %160 {strides = array<i32>} : memref<8x512xf32, #tpu.memory_space<vmem>>, vector<8x256xf32>,
    %c0_95 = arith.constant 0 : index
    %c111_96 = arith.constant 111 : index
    %162 = vector.load %arg11[%c0_95, %c111_96] : memref<8x512xf32, #tpu.memory_space<vmem>>, vector<8x256xf32>
    %163 = vector.extract_strided_slice %0 {offsets = [0, 0], sizes = [1, 256], strides = [1, 1]} : vector<9x256xf32> to vector<1x256xf32>
    %164 = vector.broadcast %163 : vector<1x256xf32> to vector<8x256xf32>
    %165 = arith.mulf %162, %164 : vector<8x256xf32>
    %c0_97 = arith.constant 0 : index
    %c112_98 = arith.constant 112 : index
    %166 = vector.load %arg11[%c0_97, %c112_98] : memref<8x512xf32, #tpu.memory_space<vmem>>, vector<8x256xf32>
    %167 = vector.extract_strided_slice %0 {offsets = [1, 0], sizes = [1, 256], strides = [1, 1]} : vector<9x256xf32> to vector<1x256xf32>
    %168 = vector.broadcast %167 : vector<1x256xf32> to vector<8x256xf32>
    %169 = arith.mulf %166, %168 : vector<8x256xf32>
    %c0_99 = arith.constant 0 : index
    %c113_100 = arith.constant 113 : index
    %170 = vector.load %arg11[%c0_99, %c113_100] : memref<8x512xf32, #tpu.memory_space<vmem>>, vector<8x256xf32>
    %171 = vector.extract_strided_slice %0 {offsets = [2, 0], sizes = [1, 256], strides = [1, 1]} : vector<9x256xf32> to vector<1x256xf32>
    %172 = vector.broadcast %171 : vector<1x256xf32> to vector<8x256xf32>
    %173 = arith.mulf %170, %172 : vector<8x256xf32>
    %c0_101 = arith.constant 0 : index
    %c127_102 = arith.constant 127 : index
    %174 = vector.load %arg11[%c0_101, %c127_102] : memref<8x512xf32, #tpu.memory_space<vmem>>, vector<8x256xf32>
    %175 = vector.extract_strided_slice %0 {offsets = [3, 0], sizes = [1, 256], strides = [1, 1]} : vector<9x256xf32> to vector<1x256xf32>
    %176 = vector.broadcast %175 : vector<1x256xf32> to vector<8x256xf32>
    %177 = arith.mulf %174, %176 : vector<8x256xf32>
    %c0_103 = arith.constant 0 : index
    %c128_104 = arith.constant 128 : index
    %178 = vector.load %arg11[%c0_103, %c128_104] : memref<8x512xf32, #tpu.memory_space<vmem>>, vector<8x256xf32>
    %c0_105 = arith.constant 0 : index
    %c129_106 = arith.constant 129 : index
    %179 = vector.load %arg11[%c0_105, %c129_106] : memref<8x512xf32, #tpu.memory_space<vmem>>, vector<8x256xf32>
    %180 = vector.extract_strided_slice %0 {offsets = [5, 0], sizes = [1, 256], strides = [1, 1]} : vector<9x256xf32> to vector<1x256xf32>
    %181 = vector.broadcast %180 : vector<1x256xf32> to vector<8x256xf32>
    %182 = arith.mulf %179, %181 : vector<8x256xf32>
    %c0_107 = arith.constant 0 : index
    %c143_108 = arith.constant 143 : index
    %183 = vector.load %arg11[%c0_107, %c143_108] : memref<8x512xf32, #tpu.memory_space<vmem>>, vector<8x256xf32>
    %184 = vector.extract_strided_slice %0 {offsets = [6, 0], sizes = [1, 256], strides = [1, 1]} : vector<9x256xf32> to vector<1x256xf32>
    %185 = vector.broadcast %184 : vector<1x256xf32> to vector<8x256xf32>
    %186 = arith.mulf %183, %185 : vector<8x256xf32>
    %c0_109 = arith.constant 0 : index
    %c144_110 = arith.constant 144 : index
    %187 = vector.load %arg11[%c0_109, %c144_110] : memref<8x512xf32, #tpu.memory_space<vmem>>, vector<8x256xf32>
    %188 = vector.extract_strided_slice %0 {offsets = [7, 0], sizes = [1, 256], strides = [1, 1]} : vector<9x256xf32> to vector<1x256xf32>
    %189 = vector.broadcast %188 : vector<1x256xf32> to vector<8x256xf32>
    %190 = arith.mulf %187, %189 : vector<8x256xf32>
    %c0_111 = arith.constant 0 : index
    %c145_112 = arith.constant 145 : index
    %191 = vector.load %arg11[%c0_111, %c145_112] : memref<8x512xf32, #tpu.memory_space<vmem>>, vector<8x256xf32>
    %192 = vector.extract_strided_slice %0 {offsets = [8, 0], sizes = [1, 256], strides = [1, 1]} : vector<9x256xf32> to vector<1x256xf32>
    %193 = vector.broadcast %192 : vector<1x256xf32> to vector<8x256xf32>
    %194 = arith.mulf %191, %193 : vector<8x256xf32>
    %195 = tpu.concatenate %165, %169, %173, %177, %178, %182, %186, %190, %194 in 0 : vector<8x256xf32>, vector<8x256xf32>, vector<8x256xf32>, vector<8x256xf32>, vector<8x256xf32>, vector<8x256xf32>, vector<8x256xf32>, vector<8x256xf32>, vector<8x256xf32> -> vector<72x256xf32>
    %c0_113 = arith.constant 0 : index
    %c0_114 = arith.constant 0 : index
    %196 = vector.load %arg8[%c0_113, %c0_114] : memref<8x72xf32, #tpu.memory_space<vmem>>, vector<8x72xf32>
    %cst_115 = arith.constant dense<0.000000e+00> : vector<8x256xf32>
    %197 = tpu.matmul %196, %195, %cst_115 {dimension_numbers = #tpu.dot_dimension_numbers<[1], [0], [0], [1], [0, 0, 1, 1], [], []>} : vector<8x72xf32>, vector<72x256xf32>, vector<8x256xf32> -> vector<8x256xf32>
    %198 = arith.addf %121, %197 : vector<8x256xf32>
    %199 = arith.addf %198, %44 : vector<8x256xf32>
    %c0_116 = arith.constant 0 : index
    %c128_117 = arith.constant 128 : index
    %200 = vector.load %arg11[%c0_116, %c128_117] : memref<8x512xf32, #tpu.memory_space<vmem>>, vector<8x256xf32>
    tpu.vector_store %arg11[%c0_116, %c128_117], %199 {strides = array<i32>} : memref<8x512xf32, #tpu.memory_space<vmem>>, vector<8x256xf32>,
    %c0_118 = arith.constant 0 : index
    %c111_119 = arith.constant 111 : index
    %201 = vector.load %arg11[%c0_118, %c111_119] : memref<8x512xf32, #tpu.memory_space<vmem>>, vector<8x256xf32>
    %202 = vector.extract_strided_slice %0 {offsets = [0, 0], sizes = [1, 256], strides = [1, 1]} : vector<9x256xf32> to vector<1x256xf32>
    %203 = vector.broadcast %202 : vector<1x256xf32> to vector<8x256xf32>
    %204 = arith.mulf %201, %203 : vector<8x256xf32>
    %c0_120 = arith.constant 0 : index
    %c112_121 = arith.constant 112 : index
    %205 = vector.load %arg11[%c0_120, %c112_121] : memref<8x512xf32, #tpu.memory_space<vmem>>, vector<8x256xf32>
    %206 = vector.extract_strided_slice %0 {offsets = [1, 0], sizes = [1, 256], strides = [1, 1]} : vector<9x256xf32> to vector<1x256xf32>
    %207 = vector.broadcast %206 : vector<1x256xf32> to vector<8x256xf32>
    %208 = arith.mulf %205, %207 : vector<8x256xf32>
    %c0_122 = arith.constant 0 : index
    %c113_123 = arith.constant 113 : index
    %209 = vector.load %arg11[%c0_122, %c113_123] : memref<8x512xf32, #tpu.memory_space<vmem>>, vector<8x256xf32>
    %210 = vector.extract_strided_slice %0 {offsets = [2, 0], sizes = [1, 256], strides = [1, 1]} : vector<9x256xf32> to vector<1x256xf32>
    %211 = vector.broadcast %210 : vector<1x256xf32> to vector<8x256xf32>
    %212 = arith.mulf %209, %211 : vector<8x256xf32>
    %c0_124 = arith.constant 0 : index
    %c127_125 = arith.constant 127 : index
    %213 = vector.load %arg11[%c0_124, %c127_125] : memref<8x512xf32, #tpu.memory_space<vmem>>, vector<8x256xf32>
    %214 = vector.extract_strided_slice %0 {offsets = [3, 0], sizes = [1, 256], strides = [1, 1]} : vector<9x256xf32> to vector<1x256xf32>
    %215 = vector.broadcast %214 : vector<1x256xf32> to vector<8x256xf32>
    %216 = arith.mulf %213, %215 : vector<8x256xf32>
    %c0_126 = arith.constant 0 : index
    %c128_127 = arith.constant 128 : index
    %217 = vector.load %arg11[%c0_126, %c128_127] : memref<8x512xf32, #tpu.memory_space<vmem>>, vector<8x256xf32>
    %c0_128 = arith.constant 0 : index
    %c129_129 = arith.constant 129 : index
    %218 = vector.load %arg11[%c0_128, %c129_129] : memref<8x512xf32, #tpu.memory_space<vmem>>, vector<8x256xf32>
    %219 = vector.extract_strided_slice %0 {offsets = [5, 0], sizes = [1, 256], strides = [1, 1]} : vector<9x256xf32> to vector<1x256xf32>
    %220 = vector.broadcast %219 : vector<1x256xf32> to vector<8x256xf32>
    %221 = arith.mulf %218, %220 : vector<8x256xf32>
    %c0_130 = arith.constant 0 : index
    %c143_131 = arith.constant 143 : index
    %222 = vector.load %arg11[%c0_130, %c143_131] : memref<8x512xf32, #tpu.memory_space<vmem>>, vector<8x256xf32>
    %223 = vector.extract_strided_slice %0 {offsets = [6, 0], sizes = [1, 256], strides = [1, 1]} : vector<9x256xf32> to vector<1x256xf32>
    %224 = vector.broadcast %223 : vector<1x256xf32> to vector<8x256xf32>
    %225 = arith.mulf %222, %224 : vector<8x256xf32>
    %c0_132 = arith.constant 0 : index
    %c144_133 = arith.constant 144 : index
    %226 = vector.load %arg11[%c0_132, %c144_133] : memref<8x512xf32, #tpu.memory_space<vmem>>, vector<8x256xf32>
    %227 = vector.extract_strided_slice %0 {offsets = [7, 0], sizes = [1, 256], strides = [1, 1]} : vector<9x256xf32> to vector<1x256xf32>
    %228 = vector.broadcast %227 : vector<1x256xf32> to vector<8x256xf32>
    %229 = arith.mulf %226, %228 : vector<8x256xf32>
    %c0_134 = arith.constant 0 : index
    %c145_135 = arith.constant 145 : index
    %230 = vector.load %arg11[%c0_134, %c145_135] : memref<8x512xf32, #tpu.memory_space<vmem>>, vector<8x256xf32>
    %231 = vector.extract_strided_slice %0 {offsets = [8, 0], sizes = [1, 256], strides = [1, 1]} : vector<9x256xf32> to vector<1x256xf32>
    %232 = vector.broadcast %231 : vector<1x256xf32> to vector<8x256xf32>
    %233 = arith.mulf %230, %232 : vector<8x256xf32>
    %234 = tpu.concatenate %204, %208, %212, %216, %217, %221, %225, %229, %233 in 0 : vector<8x256xf32>, vector<8x256xf32>, vector<8x256xf32>, vector<8x256xf32>, vector<8x256xf32>, vector<8x256xf32>, vector<8x256xf32>, vector<8x256xf32>, vector<8x256xf32> -> vector<72x256xf32>
    %c0_136 = arith.constant 0 : index
    %c0_137 = arith.constant 0 : index
    %235 = vector.load %arg9[%c0_136, %c0_137] : memref<3x72xf32, #tpu.memory_space<vmem>>, vector<3x72xf32>
    %cst_138 = arith.constant dense<0.000000e+00> : vector<3x256xf32>
    %236 = tpu.matmul %235, %234, %cst_138 {dimension_numbers = #tpu.dot_dimension_numbers<[1], [0], [0], [1], [0, 0, 1, 1], [], []>} : vector<3x72xf32>, vector<72x256xf32>, vector<3x256xf32> -> vector<3x256xf32>
    %237 = vector.extract_strided_slice %3 {offsets = [0, 0], sizes = [3, 1], strides = [1, 1]} : vector<8x1xf32> to vector<3x1xf32>
    %238 = vector.broadcast %237 : vector<3x1xf32> to vector<3x256xf32>
    %239 = arith.addf %236, %238 : vector<3x256xf32>
    %c0_139 = arith.constant 0 : index
    %c0_140 = arith.constant 0 : index
    %c0_141 = arith.constant 0 : index
    %240 = vector.load %arg10[%c0_139, %c0_140, %c0_141] : memref<1x3x256xf32, #tpu.memory_space<vmem>>, vector<1x3x256xf32>
    %241 = vector.shape_cast %240 : vector<1x3x256xf32> to vector<3x256xf32>
    %242 = vector.shape_cast %239 : vector<3x256xf32> to vector<1x3x256xf32>
    tpu.vector_store %arg10[%c0_139, %c0_140, %c0_141], %242 {strides = array<i32>} : memref<1x3x256xf32, #tpu.memory_space<vmem>>, vector<1x3x256xf32>,
    return
  }
  func.func @transform_0(%arg0: i32) -> (i32, i32) {
    %c0_i32 = arith.constant 0 : i32
    %c0_i32_0 = arith.constant 0 : i32
    %c0_i32_1 = arith.constant 0 : i32
    return %c0_i32, %c0_i32_0 : i32, i32
  }
  func.func @transform_1(%arg0: i32) -> (i32, i32) {
    %c0_i32 = arith.constant 0 : i32
    %c0_i32_0 = arith.constant 0 : i32
    %c0_i32_1 = arith.constant 0 : i32
    return %c0_i32, %c0_i32_0 : i32, i32
  }
  func.func @transform_2(%arg0: i32) -> (i32, i32, i32) {
    %c0_i32 = arith.constant 0 : i32
    %c0_i32_0 = arith.constant 0 : i32
    %c0_i32_1 = arith.constant 0 : i32
    return %arg0, %c0_i32, %c0_i32_0 : i32, i32, i32
  }
  func.func @transform_3(%arg0: i32) -> (i32, i32) {
    %c0_i32 = arith.constant 0 : i32
    %c0_i32_0 = arith.constant 0 : i32
    %c0_i32_1 = arith.constant 0 : i32
    return %c0_i32, %c0_i32_0 : i32, i32
  }
  func.func @transform_4(%arg0: i32) -> (i32, i32) {
    %c0_i32 = arith.constant 0 : i32
    %c0_i32_0 = arith.constant 0 : i32
    %c0_i32_1 = arith.constant 0 : i32
    return %c0_i32, %c0_i32_0 : i32, i32
  }
  func.func @transform_5(%arg0: i32) -> (i32, i32) {
    %c0_i32 = arith.constant 0 : i32
    %c0_i32_0 = arith.constant 0 : i32
    %c0_i32_1 = arith.constant 0 : i32
    return %c0_i32, %c0_i32_0 : i32, i32
  }
  func.func @transform_6(%arg0: i32) -> (i32, i32) {
    %c0_i32 = arith.constant 0 : i32
    %c0_i32_0 = arith.constant 0 : i32
    %c0_i32_1 = arith.constant 0 : i32
    return %c0_i32, %c0_i32_0 : i32, i32
  }
  func.func @transform_7(%arg0: i32) -> (i32, i32) {
    %c0_i32 = arith.constant 0 : i32
    %c0_i32_0 = arith.constant 0 : i32
    %c0_i32_1 = arith.constant 0 : i32
    return %c0_i32, %c0_i32_0 : i32, i32
  }
  func.func @transform_8(%arg0: i32) -> (i32, i32) {
    %c0_i32 = arith.constant 0 : i32
    %c0_i32_0 = arith.constant 0 : i32
    %c0_i32_1 = arith.constant 0 : i32
    return %c0_i32, %c0_i32_0 : i32, i32
  }
  func.func @transform_9(%arg0: i32) -> (i32, i32, i32) {
    %c0_i32 = arith.constant 0 : i32
    %c0_i32_0 = arith.constant 0 : i32
    %c0_i32_1 = arith.constant 0 : i32
    return %arg0, %c0_i32, %c0_i32_0 : i32, i32, i32
  }
}

</mosaic_0001>

<llo_original>
// kernel: reverse.1
$region0: #{reverse.1}
  %s0 = inlined_call_operand.vmem [shape: f32[8], index: 0, kind: input, shape index: {}]
  %s1 = inlined_call_operand.vmem [shape: f32[8], index: 1, kind: output, shape index: {}]
  %v2 = vlaneseq
  %v3 = vsub.s32 7, %v2
  %4 = vset.pattern.permute.xlu0 %v3
  $region1: #{reverse.1} parent=0
    #allocation0 [shape = 'u8[8192]{0}', space=vmem, size = 0x2000, scoped, tag = 'operand span for operand 0']
    #allocation1 [shape = 'u8[1024]{0}', space=vmem, size = 0x400, scoped, tag = 'packed  for operand 0']
    #allocation2 [shape = 'u8[4096]{0}', space=vmem, size = 0x1000, scoped, tag = 'operand span for operand 1']
    #allocation3 [shape = 'u8[512]{0}', space=vmem, size = 0x400, scoped, tag = 'packed  for operand 1']
    %s5 = scalar_lea.vmem [#allocation1], 1
    // Predicated region
    $region2: #{reverse.1} parent=1 // pred_check
      _
    $region3: #{reverse.1} parent=1 // pred_check_branch
      %7 = sbr.rel (0) target = $region5
    $region4: #{reverse.1} parent=1 // pred_region
      // Predicated region
      $region6: #{reverse.1} parent=4 // pred_check
        _
      $region7: #{reverse.1} parent=4 // pred_check_branch
        %9 = sbr.rel target = $region9
      $region8: #{reverse.1} parent=4 // pred_region
        // Predicated region
        $region21: #{reverse.1} parent=8 // pred_check
          _
        $region22: #{reverse.1} parent=8 // pred_check_branch
          %25 = sbr.rel (0) target = $region24
        $region23: #{reverse.1} parent=8 // pred_region
          %s27 = ssub.s32 2, 1
          loop: start=0, step=1, limit=1
          $region25: #{reverse.1} parent=23 // loop_pre_header
            _
          $region26: #{reverse.1} parent=23 // loop_header
            %s29 = sphi 0, %s33
            %p30 = scmp.ge.s32.totalorder %s29, 1
            %s34 = sphi %s0, %s0
            %s35 = sphi %s5, %s5
          $region27: #{reverse.1} parent=23 // loop_header_branch
            %32 = sbr.rel (%p30) target = $region31
          $region28: #{reverse.1} parent=23 // loop_body
            %v36 = vld [vmem:[%s34] sm:%s27]
            %37 = vst [vmem:[%s35] sm:%s27] %v36
          $region29: #{reverse.1} parent=23 // loop_footer
            %s33 = sadd.s32 1, %s29
          $region30: #{reverse.1} parent=23 // loop_footer_branch
            %28 = sbr.rel target = $region26
          $region31: #{reverse.1} parent=23 // loop_exit
            _
        $region24: #{reverse.1} parent=8 // pred_fallthru
          _
      $region9: #{reverse.1} parent=4 // pred_fallthru
        _
      // Predicated region
      $region10: #{reverse.1} parent=4 // pred_check
        _
      $region11: #{reverse.1} parent=4 // pred_check_branch
        %11 = sbr.rel (0) target = $region13
      $region12: #{reverse.1} parent=4 // pred_region
        %s13 = ssub.s32 2, 1
        loop: start=0, step=1, limit=1
        $region14: #{reverse.1} parent=12 // loop_pre_header
          _
        $region15: #{reverse.1} parent=12 // loop_header
          %s15 = sphi 0, %s19
          %p16 = scmp.ge.s32.totalorder %s15, 1
          %s20 = sphi %s0, %s0
          %s21 = sphi %s5, %s5
        $region16: #{reverse.1} parent=12 // loop_header_branch
          %18 = sbr.rel (%p16) target = $region20
        $region17: #{reverse.1} parent=12 // loop_body
          %v22 = vld [vmem:[%s20] sm:%s13]
          %23 = vst [vmem:[%s21] sm:%s13] %v22
        $region18: #{reverse.1} parent=12 // loop_footer
          %s19 = sadd.s32 1, %s15
        $region19: #{reverse.1} parent=12 // loop_footer_branch
          %14 = sbr.rel target = $region15
        $region20: #{reverse.1} parent=12 // loop_exit
          _
      $region13: #{reverse.1} parent=4 // pred_fallthru
        _
    $region5: #{reverse.1} parent=1 // pred_fallthru
      _
    %38 = vnop
    %s40 = sshll.u32 1, 1
    %s41 = ssub.s32 %s40, 1
    %s42 = scalar_lea.vmem [#allocation1], 1
    %v43 = vld [vmem:[%s42] sm:%s41]
    %s44 = scalar_lea.vmem [#allocation0], 8
    %45 = vst [vmem:[%s44] sm:%s41] %v43
    %v46 = vld [vmem:[#allocation1] sm:%s41]
    %47 = vst [vmem:[#allocation0] sm:%s41] %v46
    %s48 = scalar_lea.vmem [#allocation0], 7
    %v49 = vld [vmem:[%s48] ss:$-1 sm:$0xff]
    %v50 = vrot.slane %v49, 7
    %51 = vperm.xlu0 %4, %v50
    %v52 = vpop.permute.xlu0 %51
    %53 = vst [vmem:[#allocation2] sm:$0xff] %v52
    %s54 = scalar_lea.vmem [#allocation0], 8
    %s55 = scalar_lea.vmem %s54, 7 [#allocation0]
    %v56 = vld [vmem:[%s55] ss:$-1 sm:$0xff]
    %v57 = vrot.slane %v56, 7
    %58 = vperm.xlu0 %4, %v57
    %v59 = vpop.permute.xlu0 %58
    %v60 = vlaneseq
    %v61 = vshrl.u32 %v60, 7
    %vm62 = vcmp.lt.s32.totalorder %v61, 1
    %63 = vst.msk [vmem:[#allocation2] sm:$0xff] %vm62, %v59
    %s65 = sshll.u32 1, 1
    %s66 = ssub.s32 %s65, 1
    %v68 = vld [vmem:[#allocation2] sm:%s66]
    %s69 = sshll.u32 1, 1
    %s70 = ssub.s32 %s69, 1
    %71 = vst [vmem:[#allocation3] sm:%s70] %v68
    // Predicated region
    $region32: #{reverse.1} parent=1 // pred_check
      _
    $region33: #{reverse.1} parent=1 // pred_check_branch
      %73 = sbr.rel (0) target = $region35
    $region34: #{reverse.1} parent=1 // pred_region
      // Predicated region
      $region36: #{reverse.1} parent=34 // pred_check
        _
      $region37: #{reverse.1} parent=34 // pred_check_branch
        %75 = sbr.rel target = $region39
      $region38: #{reverse.1} parent=34 // pred_region
        // Predicated region
        $region51: #{reverse.1} parent=38 // pred_check
          _
        $region52: #{reverse.1} parent=38 // pred_check_branch
          %91 = sbr.rel (0) target = $region54
        $region53: #{reverse.1} parent=38 // pred_region
          %s93 = ssub.s32 2, 1
          loop: start=0, step=1, limit=1
          $region55: #{reverse.1} parent=53 // loop_pre_header
            _
          $region56: #{reverse.1} parent=53 // loop_header
            %s95 = sphi 0, %s99
            %p96 = scmp.ge.s32.totalorder %s95, 1
            %s100 = sphi [#allocation3], [#allocation3]
            %s101 = sphi %s1, %s1
          $region57: #{reverse.1} parent=53 // loop_header_branch
            %98 = sbr.rel (%p96) target = $region61
          $region58: #{reverse.1} parent=53 // loop_body
            %v102 = vld [vmem:[%s100] sm:%s93]
            %103 = vst [vmem:[%s101] sm:%s93] %v102
          $region59: #{reverse.1} parent=53 // loop_footer
            %s99 = sadd.s32 1, %s95
          $region60: #{reverse.1} parent=53 // loop_footer_branch
            %94 = sbr.rel target = $region56
          $region61: #{reverse.1} parent=53 // loop_exit
            _
        $region54: #{reverse.1} parent=38 // pred_fallthru
          _
      $region39: #{reverse.1} parent=34 // pred_fallthru
        _
      // Predicated region
      $region40: #{reverse.1} parent=34 // pred_check
        _
      $region41: #{reverse.1} parent=34 // pred_check_branch
        %77 = sbr.rel (0) target = $region43
      $region42: #{reverse.1} parent=34 // pred_region
        %s79 = ssub.s32 2, 1
        loop: start=0, step=1, limit=1
        $region44: #{reverse.1} parent=42 // loop_pre_header
          _
        $region45: #{reverse.1} parent=42 // loop_header
          %s81 = sphi 0, %s85
          %p82 = scmp.ge.s32.totalorder %s81, 1
          %s86 = sphi [#allocation3], [#allocation3]
          %s87 = sphi %s1, %s1
        $region46: #{reverse.1} parent=42 // loop_header_branch
          %84 = sbr.rel (%p82) target = $region50
        $region47: #{reverse.1} parent=42 // loop_body
          %v88 = vld [vmem:[%s86] sm:%s79]
          %89 = vst [vmem:[%s87] sm:%s79] %v88
        $region48: #{reverse.1} parent=42 // loop_footer
          %s85 = sadd.s32 1, %s81
        $region49: #{reverse.1} parent=42 // loop_footer_branch
          %80 = sbr.rel target = $region45
        $region50: #{reverse.1} parent=42 // loop_exit
          _
      $region43: #{reverse.1} parent=34 // pred_fallthru
        _
    $region35: #{reverse.1} parent=1 // pred_fallthru
      _
    %104 = vnop

// kernel: edsr_gated_forward.1
$region0: #{edsr_gated_forward.1}
  #allocation0 [shape = 'u32[]', space=smem, size = 0x4, offset = 0x4, fixed_abs, tag = 'smem constant byte address 0x4 - core index']
  #allocation1 [shape = 'u32[144,128]{1,0:T(1,128)}', space=vmem, size = 0x12000, scoped, tag = 'internal scratch']
  #allocation2 [shape = 'f32[8,512]{1,0:T(8,128)}', space=vmem, size = 0x4000, scoped, tag = 'scratch operand']
  %s0 = inlined_call_operand.vmem [shape: f32[8,1], index: 0, kind: input, shape index: {}]
  %s1 = inlined_call_operand.vmem [shape: f32[9,256], index: 1, kind: input, shape index: {}]
  %s2 = inlined_call_operand.vmem [shape: f32[2,8,256], index: 2, kind: input, shape index: {}]
  %s3 = inlined_call_operand.vmem [shape: f32[8,72], index: 3, kind: input, shape index: {}]
  %s4 = inlined_call_operand.vmem [shape: f32[8,72], index: 4, kind: input, shape index: {}]
  %s5 = inlined_call_operand.vmem [shape: f32[8,72], index: 5, kind: input, shape index: {}]
  %s6 = inlined_call_operand.vmem [shape: f32[8,72], index: 6, kind: input, shape index: {}]
  %s7 = inlined_call_operand.vmem [shape: f32[8,72], index: 7, kind: input, shape index: {}]
  %s8 = inlined_call_operand.vmem [shape: f32[3,72], index: 8, kind: input, shape index: {}]
  %s9 = inlined_call_operand.vmem [shape: f32[2,3,256], index: 9, kind: output, shape index: {}]
  %s10 = sld [smem:[#allocation0]]
  $region69: #{edsr_gated_forward.1} parent=0
    _
  %s12 = ssub.s32 1, %s10
  %s13 = scalar_select 0, %s12, %s10
  loop: start=0, step=1, limit=4
  $region2: #{edsr_gated_forward.1} parent=0 // loop_pre_header
    _
  $region3: #{edsr_gated_forward.1} parent=0 // loop_header
    %s15 = sphi 0, %s19
    %p16 = scmp.ge.s32.totalorder %s15, 4
    %s23 = sphi 0, %s23
    %s25 = sphi 0, %s23
    %s26 = sphi 0, %s25
    %s40 = sphi 0, %s26
    %s44 = sphi 0, %s44
    %s46 = sphi 0, %s44
    %s47 = sphi 0, %s46
    %s61 = sphi 0, %s47
    %s67 = sphi 0, %s69
    %s70 = sphi 0, %s67
    %s71 = sphi 0, %s70
    %s87 = sphi 0, %s71
    %s91 = sphi 0, %s91
    %s93 = sphi 0, %s91
    %s94 = sphi 0, %s93
    %s108 = sphi 0, %s94
    %s112 = sphi 0, %s112
    %s114 = sphi 0, %s112
    %s115 = sphi 0, %s114
    %s129 = sphi 0, %s115
    %s133 = sphi 0, %s133
    %s135 = sphi 0, %s133
    %s136 = sphi 0, %s135
    %s150 = sphi 0, %s136
    %s154 = sphi 0, %s154
    %s156 = sphi 0, %s154
    %s157 = sphi 0, %s156
    %s171 = sphi 0, %s157
    %s175 = sphi 0, %s175
    %s177 = sphi 0, %s175
    %s178 = sphi 0, %s177
    %s192 = sphi 0, %s178
    %s196 = sphi 0, %s196
    %s198 = sphi 0, %s196
    %s199 = sphi 0, %s198
    %s213 = sphi 0, %s199
    %s219 = sphi 0, %s221
    %s222 = sphi 0, %s219
    %s223 = sphi 0, %s222
    %s239 = sphi 0, %s223
  $region4: #{edsr_gated_forward.1} parent=0 // loop_header_branch
    %18 = sbr.rel (%p16) target = $region8
  $region5: #{edsr_gated_forward.1} parent=0 // loop_body
    %s20 = ssub.s32 %s15, 1
    %s21 = ssub.s32 %s15, 2
    %s22 = sadd.s32 %s15, 1
    %s24 = sadd.s32 %s23, 1
    %p27 = scmp.eq.s32.totalorder %s15, 1
    %p28 = scmp.ne.s32.totalorder %s23, %s25
    %p29 = scmp.eq.s32.totalorder %s15, 0
    %p30 = por %p28, %p29
    %p31 = scmp.ne.s32.totalorder %s23, %s25
    %p32 = scmp.eq.s32.totalorder %s20, 1
    %p33 = por %p31, %p32
    %p34 = scmp.ne.s32.totalorder %s25, %s26
    %p35 = scmp.eq.s32.totalorder %s20, 0
    %p36 = por %p34, %p35
    %p37 = scmp.ne.s32.totalorder %s25, %s26
    %p38 = scmp.eq.s32.totalorder %s21, 1
    %p39 = por %p37, %p38
    %p41 = scmp.ne.s32.totalorder %s26, %s40
    %p42 = scmp.eq.s32.totalorder %s21, 0
    %p43 = por %p41, %p42
    %s45 = sadd.s32 %s44, 1
    %p48 = scmp.eq.s32.totalorder %s15, 1
    %p49 = scmp.ne.s32.totalorder %s44, %s46
    %p50 = scmp.eq.s32.totalorder %s15, 0
    %p51 = por %p49, %p50
    %p52 = scmp.ne.s32.totalorder %s44, %s46
    %p53 = scmp.eq.s32.totalorder %s20, 1
    %p54 = por %p52, %p53
    %p55 = scmp.ne.s32.totalorder %s46, %s47
    %p56 = scmp.eq.s32.totalorder %s20, 0
    %p57 = por %p55, %p56
    %p58 = scmp.ne.s32.totalorder %s46, %s47
    %p59 = scmp.eq.s32.totalorder %s21, 1
    %p60 = por %p58, %p59
    %p62 = scmp.ne.s32.totalorder %s47, %s61
    %p63 = scmp.eq.s32.totalorder %s21, 0
    %p64 = por %p62, %p63
    %s65 = ssub.s32 %s15, %s22
    %p66 = scmp.eq.s32.totalorder %s65, 0
    %s68 = sadd.s32 %s67, 1
    %s69 = scalar_select %p66, %s67, %s68
    %p72 = pneg %p66
    %p73 = scmp.eq.s32.totalorder %s15, 1
    %p74 = por %p72, %p73
    %p75 = scmp.ne.s32.totalorder %s67, %s70
    %p76 = scmp.eq.s32.totalorder %s15, 0
    %p77 = por %p75, %p76
    %p78 = scmp.ne.s32.totalorder %s67, %s70
    %p79 = scmp.eq.s32.totalorder %s20, 1
    %p80 = por %p78, %p79
    %p81 = scmp.ne.s32.totalorder %s70, %s71
    %p82 = scmp.eq.s32.totalorder %s20, 0
    %p83 = por %p81, %p82
    %p84 = scmp.ne.s32.totalorder %s70, %s71
    %p85 = scmp.eq.s32.totalorder %s21, 1
    %p86 = por %p84, %p85
    %p88 = scmp.ne.s32.totalorder %s71, %s87
    %p89 = scmp.eq.s32.totalorder %s21, 0
    %p90 = por %p88, %p89
    %s92 = sadd.s32 %s91, 1
    %p95 = scmp.eq.s32.totalorder %s15, 1
    %p96 = scmp.ne.s32.totalorder %s91, %s93
    %p97 = scmp.eq.s32.totalorder %s15, 0
    %p98 = por %p96, %p97
    %p99 = scmp.ne.s32.totalorder %s91, %s93
    %p100 = scmp.eq.s32.totalorder %s20, 1
    %p101 = por %p99, %p100
    %p102 = scmp.ne.s32.totalorder %s93, %s94
    %p103 = scmp.eq.s32.totalorder %s20, 0
    %p104 = por %p102, %p103
    %p105 = scmp.ne.s32.totalorder %s93, %s94
    %p106 = scmp.eq.s32.totalorder %s21, 1
    %p107 = por %p105, %p106
    %p109 = scmp.ne.s32.totalorder %s94, %s108
    %p110 = scmp.eq.s32.totalorder %s21, 0
    %p111 = por %p109, %p110
    %s113 = sadd.s32 %s112, 1
    %p116 = scmp.eq.s32.totalorder %s15, 1
    %p117 = scmp.ne.s32.totalorder %s112, %s114
    %p118 = scmp.eq.s32.totalorder %s15, 0
    %p119 = por %p117, %p118
    %p120 = scmp.ne.s32.totalorder %s112, %s114
    %p121 = scmp.eq.s32.totalorder %s20, 1
    %p122 = por %p120, %p121
    %p123 = scmp.ne.s32.totalorder %s114, %s115
    %p124 = scmp.eq.s32.totalorder %s20, 0
    %p125 = por %p123, %p124
    %p126 = scmp.ne.s32.totalorder %s114, %s115
    %p127 = scmp.eq.s32.totalorder %s21, 1
    %p128 = por %p126, %p127
    %p130 = scmp.ne.s32.totalorder %s115, %s129
    %p131 = scmp.eq.s32.totalorder %s21, 0
    %p132 = por %p130, %p131
    %s134 = sadd.s32 %s133, 1
    %p137 = scmp.eq.s32.totalorder %s15, 1
    %p138 = scmp.ne.s32.totalorder %s133, %s135
    %p139 = scmp.eq.s32.totalorder %s15, 0
    %p140 = por %p138, %p139
    %p141 = scmp.ne.s32.totalorder %s133, %s135
    %p142 = scmp.eq.s32.totalorder %s20, 1
    %p143 = por %p141, %p142
    %p144 = scmp.ne.s32.totalorder %s135, %s136
    %p145 = scmp.eq.s32.totalorder %s20, 0
    %p146 = por %p144, %p145
    %p147 = scmp.ne.s32.totalorder %s135, %s136
    %p148 = scmp.eq.s32.totalorder %s21, 1
    %p149 = por %p147, %p148
    %p151 = scmp.ne.s32.totalorder %s136, %s150
    %p152 = scmp.eq.s32.totalorder %s21, 0
    %p153 = por %p151, %p152
    %s155 = sadd.s32 %s154, 1
    %p158 = scmp.eq.s32.totalorder %s15, 1
    %p159 = scmp.ne.s32.totalorder %s154, %s156
    %p160 = scmp.eq.s32.totalorder %s15, 0
    %p161 = por %p159, %p160
    %p162 = scmp.ne.s32.totalorder %s154, %s156
    %p163 = scmp.eq.s32.totalorder %s20, 1
    %p164 = por %p162, %p163
    %p165 = scmp.ne.s32.totalorder %s156, %s157
    %p166 = scmp.eq.s32.totalorder %s20, 0
    %p167 = por %p165, %p166
    %p168 = scmp.ne.s32.totalorder %s156, %s157
    %p169 = scmp.eq.s32.totalorder %s21, 1
    %p170 = por %p168, %p169
    %p172 = scmp.ne.s32.totalorder %s157, %s171
    %p173 = scmp.eq.s32.totalorder %s21, 0
    %p174 = por %p172, %p173
    %s176 = sadd.s32 %s175, 1
    %p179 = scmp.eq.s32.totalorder %s15, 1
    %p180 = scmp.ne.s32.totalorder %s175, %s177
    %p181 = scmp.eq.s32.totalorder %s15, 0
    %p182 = por %p180, %p181
    %p183 = scmp.ne.s32.totalorder %s175, %s177
    %p184 = scmp.eq.s32.totalorder %s20, 1
    %p185 = por %p183, %p184
    %p186 = scmp.ne.s32.totalorder %s177, %s178
    %p187 = scmp.eq.s32.totalorder %s20, 0
    %p188 = por %p186, %p187
    %p189 = scmp.ne.s32.totalorder %s177, %s178
    %p190 = scmp.eq.s32.totalorder %s21, 1
    %p191 = por %p189, %p190
    %p193 = scmp.ne.s32.totalorder %s178, %s192
    %p194 = scmp.eq.s32.totalorder %s21, 0
    %p195 = por %p193, %p194
    %s197 = sadd.s32 %s196, 1
    %p200 = scmp.eq.s32.totalorder %s15, 1
    %p201 = scmp.ne.s32.totalorder %s196, %s198
    %p202 = scmp.eq.s32.totalorder %s15, 0
    %p203 = por %p201, %p202
    %p204 = scmp.ne.s32.totalorder %s196, %s198
    %p205 = scmp.eq.s32.totalorder %s20, 1
    %p206 = por %p204, %p205
    %p207 = scmp.ne.s32.totalorder %s198, %s199
    %p208 = scmp.eq.s32.totalorder %s20, 0
    %p209 = por %p207, %p208
    %p210 = scmp.ne.s32.totalorder %s198, %s199
    %p211 = scmp.eq.s32.totalorder %s21, 1
    %p212 = por %p210, %p211
    %p214 = scmp.ne.s32.totalorder %s199, %s213
    %p215 = scmp.eq.s32.totalorder %s21, 0
    %p216 = por %p214, %p215
    %s217 = ssub.s32 %s15, %s22
    %p218 = scmp.eq.s32.totalorder %s217, 0
    %s220 = sadd.s32 %s219, 1
    %s221 = scalar_select %p218, %s219, %s220
    %p224 = pneg %p218
    %p225 = scmp.eq.s32.totalorder %s15, 1
    %p226 = por %p224, %p225
    %p227 = scmp.ne.s32.totalorder %s219, %s222
    %p228 = scmp.eq.s32.totalorder %s15, 0
    %p229 = por %p227, %p228
    %p230 = scmp.ne.s32.totalorder %s219, %s222
    %p231 = scmp.eq.s32.totalorder %s20, 1
    %p232 = por %p230, %p231
    %p233 = scmp.ne.s32.totalorder %s222, %s223
    %p234 = scmp.eq.s32.totalorder %s20, 0
    %p235 = por %p233, %p234
    %p236 = scmp.ne.s32.totalorder %s222, %s223
    %p237 = scmp.eq.s32.totalorder %s21, 1
    %p238 = por %p236, %p237
    %p240 = scmp.ne.s32.totalorder %s223, %s239
    %p241 = scmp.eq.s32.totalorder %s21, 0
    %p242 = por %p240, %p241
    %p243 = scmp.le.s32.totalorder 1, %s15
    %p244 = scmp.lt.s32.totalorder %s15, 3
    %p245 = pnand %p243, %p244
    %p246 = pneg %p245
    // Predicated region
    $region9: #{edsr_gated_forward.1} parent=5 // pred_check
      _
    $region10: #{edsr_gated_forward.1} parent=5 // pred_check_branch
      %248 = sbr.rel (%p245) target = $region12
    $region11: #{edsr_gated_forward.1} parent=5 // pred_region
      %s249 = ssub.s32 %s15, 1
      // Predicated region
      $region13: #{edsr_gated_forward.1} parent=11 // pred_check
        %p250 = pneg %p36
      $region14: #{edsr_gated_forward.1} parent=11 // pred_check_branch
        %252 = sbr.rel (%p250) target = $region16
      $region15: #{edsr_gated_forward.1} parent=11 // pred_region
        _
      $region16: #{edsr_gated_forward.1} parent=11 // pred_fallthru
        _
      // Predicated region
      $region17: #{edsr_gated_forward.1} parent=11 // pred_check
        %p253 = pneg %p57
      $region18: #{edsr_gated_forward.1} parent=11 // pred_check_branch
        %255 = sbr.rel (%p253) target = $region20
      $region19: #{edsr_gated_forward.1} parent=11 // pred_region
        _
      $region20: #{edsr_gated_forward.1} parent=11 // pred_fallthru
        _
      // Predicated region
      $region21: #{edsr_gated_forward.1} parent=11 // pred_check
        %p256 = pneg %p104
      $region22: #{edsr_gated_forward.1} parent=11 // pred_check_branch
        %258 = sbr.rel (%p256) target = $region24
      $region23: #{edsr_gated_forward.1} parent=11 // pred_region
        _
      $region24: #{edsr_gated_forward.1} parent=11 // pred_fallthru
        _
      // Predicated region
      $region25: #{edsr_gated_forward.1} parent=11 // pred_check
        %p259 = pneg %p125
      $region26: #{edsr_gated_forward.1} parent=11 // pred_check_branch
        %261 = sbr.rel (%p259) target = $region28
      $region27: #{edsr_gated_forward.1} parent=11 // pred_region
        _
      $region28: #{edsr_gated_forward.1} parent=11 // pred_fallthru
        _
      // Predicated region
      $region29: #{edsr_gated_forward.1} parent=11 // pred_check
        %p262 = pneg %p146
      $region30: #{edsr_gated_forward.1} parent=11 // pred_check_branch
        %264 = sbr.rel (%p262) target = $region32
      $region31: #{edsr_gated_forward.1} parent=11 // pred_region
        _
      $region32: #{edsr_gated_forward.1} parent=11 // pred_fallthru
        _
      // Predicated region
      $region33: #{edsr_gated_forward.1} parent=11 // pred_check
        %p265 = pneg %p167
      $region34: #{edsr_gated_forward.1} parent=11 // pred_check_branch
        %267 = sbr.rel (%p265) target = $region36
      $region35: #{edsr_gated_forward.1} parent=11 // pred_region
        _
      $region36: #{edsr_gated_forward.1} parent=11 // pred_fallthru
        _
      // Predicated region
      $region37: #{edsr_gated_forward.1} parent=11 // pred_check
        %p268 = pneg %p188
      $region38: #{edsr_gated_forward.1} parent=11 // pred_check_branch
        %270 = sbr.rel (%p268) target = $region40
      $region39: #{edsr_gated_forward.1} parent=11 // pred_region
        _
      $region40: #{edsr_gated_forward.1} parent=11 // pred_fallthru
        _
      // Predicated region
      $region41: #{edsr_gated_forward.1} parent=11 // pred_check
        %p271 = pneg %p209
      $region42: #{edsr_gated_forward.1} parent=11 // pred_check_branch
        %273 = sbr.rel (%p271) target = $region44
      $region43: #{edsr_gated_forward.1} parent=11 // pred_region
        _
      $region44: #{edsr_gated_forward.1} parent=11 // pred_fallthru
        _
    $region12: #{edsr_gated_forward.1} parent=5 // pred_fallthru
      _
    %p274 = scmp.lt.s32.totalorder %s15, 2
    // Predicated region
    $region45: #{edsr_gated_forward.1} parent=5 // pred_check
      %p275 = pneg %p274
    $region46: #{edsr_gated_forward.1} parent=5 // pred_check_branch
      %277 = sbr.rel (%p275) target = $region48
    $region47: #{edsr_gated_forward.1} parent=5 // pred_region
      // Predicated region
      $region49: #{edsr_gated_forward.1} parent=47 // pred_check
        %p278 = pneg %p77
      $region50: #{edsr_gated_forward.1} parent=47 // pred_check_branch
        %280 = sbr.rel (%p278) target = $region52
      $region51: #{edsr_gated_forward.1} parent=47 // pred_region
        %p281 = scmp.lt.s32.totalorder %s15, 1
        %s282 = scalar_select %p281, %s15, 1
        %s283 = smul.addr %s282, 2
        %s284 = smul.addr %s283, 8
        %s285 = scalar_lea.vmem %s2, %s284
      $region52: #{edsr_gated_forward.1} parent=47 // pred_fallthru
        _
    $region48: #{edsr_gated_forward.1} parent=5 // pred_fallthru
      _
    %p286 = scmp.le.s32.totalorder 1, %s15
    %p287 = scmp.lt.s32.totalorder %s15, 3
    %p288 = pnand %p286, %p287
    %p289 = pneg %p288
    // Predicated region
    $region53: #{edsr_gated_forward.1} parent=5 // pred_check
      _
    $region54: #{edsr_gated_forward.1} parent=5 // pred_check_branch
      %291 = sbr.rel (%p288) target = $region56
    $region55: #{edsr_gated_forward.1} parent=5 // pred_region
      %s292 = ssub.s32 %s15, 1
      %p293 = pneg %p36
      %p294 = pneg %p33
      %p295 = pneg %p57
      %p296 = pneg %p54
      %p297 = scmp.lt.s32.totalorder %s20, 1
      %s298 = scalar_select %p297, %s20, 1
      %s299 = smul.addr %s298, 2
      %s300 = smul.addr %s299, 8
      %s301 = scalar_lea.vmem %s2, %s300
      %p302 = pneg %p83
      %p303 = pneg %p80
      %p304 = pneg %p104
      %p305 = pneg %p101
      %p306 = pneg %p125
      %p307 = pneg %p122
      %p308 = pneg %p146
      %p309 = pneg %p143
      %p310 = pneg %p167
      %p311 = pneg %p164
      %p312 = pneg %p188
      %p313 = pneg %p185
      %p314 = pneg %p209
      %p315 = pneg %p206
      %p316 = pneg %p235
      %p317 = pneg %p232
      %p318 = scmp.lt.s32.totalorder %s20, 1
      %s319 = scalar_select %p318, %s20, 1
      %s320 = smul.addr %s319, 2
      %s321 = smul.addr %s320, 4
      %s322 = scalar_lea.vmem %s9, %s321
      %p323 = scmp.lt.s32.totalorder %s20, 1
      %s324 = scalar_select %p323, %s20, 1
      %s325 = smul.addr %s324, 2
      %s326 = smul.addr %s325, 8
      %s327 = scalar_lea.vmem %s2, %s326
      %p328 = scmp.lt.s32.totalorder %s20, 1
      %s329 = scalar_select %p328, %s20, 1
      %s330 = smul.addr %s329, 2
      %s331 = smul.addr %s330, 4
      %s332 = scalar_lea.vmem %s9, %s331
      %v333 = vld [vmem:[%s1] sm:$0xff]
      %v334 = vld [vmem:[%s1 + $0x8] sm:$0xff]
      %v335 = vld [vmem:[%s1 + $0x10] sm:$0x1]
      %v336 = vld [vmem:[%s1 + $0x18] sm:$0x1]
      %337 = vst [vmem:[#allocation2] sm:$0xff] 0.0
      %338 = vst [vmem:[#allocation2 + $0x8] sm:$0xff] 0.0
      %339 = vst [vmem:[#allocation2 + $0x10] sm:$0xff] 0.0
      %340 = vst [vmem:[#allocation2 + $0x18] sm:$0xff] 0.0
      %v341 = vld [vmem:[%s0] sm:$0xff]
      %v342 = vld [vmem:[%s327] sm:$0xff]
      %v343 = vld [vmem:[%s327 + $0x8] sm:$0xff]
      %345 = vset.pattern.permute.xlu0 0
      %346 = vperm.xlu0 %345, %v341
      %v347 = vpop.permute.xlu0 %346
      %v349 = vsub.f32 %v342, %v347
      %v350 = vsub.f32 %v343, %v347
      %351 = vst [vmem:[#allocation2 + $0x8] sm:$0xff] %v349
      %352 = vst [vmem:[#allocation2 + $0x10] sm:$0xff] %v350
      %v353 = vld [vmem:[#allocation2] sm:$0xff]
      %v354 = vld [vmem:[#allocation2 + $0x8] sm:$0xff]
      %v355 = vld [vmem:[#allocation2 + $0x10] sm:$0xff]
      %v356 = vlaneseq
      %v357 = vshrl.u32 %v356, 7
      %v358 = vsub.s32 0, %v357
      %v359 = vrot.slane %v333, %v358
      %v360 = vlaneseq
      %v361 = vshrl.u32 %v360, 7
      %v362 = vsub.s32 0, %v361
      %v363 = vrot.slane %v334, %v362
      %366 = vrot.lane.b32.xlu0 %v359, 111
      %v367 = vpop.permute.xlu0 %366
      %368 = vrot.lane.b32.xlu0 %v363, 111
      %v369 = vpop.permute.xlu0 %368
      %vm370 = vcmask 908288
      %v371 = vsel %vm370, %v367, %v369
      %v375 = vmul.f32 %v353, %v367
      %v376 = vmul.f32 %v354, %v371
      %v377 = vmul.f32 %v355, %v369
      %v378 = vlaneseq
      %v379 = vshrl.u32 %v378, 7
      %v380 = vsub.s32 1, %v379
      %v381 = vrot.slane %v333, %v380
      %v382 = vlaneseq
      %v383 = vshrl.u32 %v382, 7
      %v384 = vsub.s32 1, %v383
      %v385 = vrot.slane %v334, %v384
      %388 = vrot.lane.b32.xlu0 %v381, 112
      %v389 = vpop.permute.xlu0 %388
      %390 = vrot.lane.b32.xlu0 %v385, 112
      %v391 = vpop.permute.xlu0 %390
      %vm392 = vcmask 916480
      %v393 = vsel %vm392, %v389, %v391
      %v397 = vmul.f32 %v353, %v389
      %v398 = vmul.f32 %v354, %v393
      %v399 = vmul.f32 %v355, %v391
      %v400 = vlaneseq
      %v401 = vshrl.u32 %v400, 7
      %v402 = vsub.s32 2, %v401
      %v403 = vrot.slane %v333, %v402
      %v404 = vlaneseq
      %v405 = vshrl.u32 %v404, 7
      %v406 = vsub.s32 2, %v405
      %v407 = vrot.slane %v334, %v406
      %410 = vrot.lane.b32.xlu0 %v403, 113
      %v411 = vpop.permute.xlu0 %410
      %412 = vrot.lane.b32.xlu0 %v407, 113
      %v413 = vpop.permute.xlu0 %412
      %vm414 = vcmask 924672
      %v415 = vsel %vm414, %v411, %v413
      %v419 = vmul.f32 %v353, %v411
      %v420 = vmul.f32 %v354, %v415
      %v421 = vmul.f32 %v355, %v413
      %v422 = vlaneseq
      %v423 = vshrl.u32 %v422, 7
      %v424 = vsub.s32 3, %v423
      %v425 = vrot.slane %v333, %v424
      %v426 = vlaneseq
      %v427 = vshrl.u32 %v426, 7
      %v428 = vsub.s32 3, %v427
      %v429 = vrot.slane %v334, %v428
      %432 = vrot.lane.b32.xlu0 %v425, 127
      %v433 = vpop.permute.xlu0 %432
      %434 = vrot.lane.b32.xlu0 %v429, 127
      %v435 = vpop.permute.xlu0 %434
      %vm436 = vcmask 1039360
      %v437 = vsel %vm436, %v433, %v435
      %v441 = vmul.f32 %v353, %v433
      %v442 = vmul.f32 %v354, %v437
      %v443 = vmul.f32 %v355, %v435
      %v444 = vld [vmem:[#allocation2 + $0x8] sm:$0xff]
      %v445 = vld [vmem:[#allocation2 + $0x10] sm:$0xff]
      %v446 = vld [vmem:[#allocation2 + $0x18] sm:$0xff]
      %v447 = vlaneseq
      %v448 = vshrl.u32 %v447, 7
      %v449 = vsub.s32 5, %v448
      %v450 = vrot.slane %v333, %v449
      %v451 = vlaneseq
      %v452 = vshrl.u32 %v451, 7
      %v453 = vsub.s32 5, %v452
      %v454 = vrot.slane %v334, %v453
      %457 = vrot.lane.b32.xlu0 %v450, 1
      %v458 = vpop.permute.xlu0 %457
      %459 = vrot.lane.b32.xlu0 %v454, 1
      %v460 = vpop.permute.xlu0 %459
      %vm461 = vcmask 7168
      %v462 = vsel %vm461, %v458, %v460
      %v466 = vmul.f32 %v444, %v458
      %v467 = vmul.f32 %v445, %v462
      %v468 = vmul.f32 %v446, %v460
      %v469 = vlaneseq
      %v470 = vshrl.u32 %v469, 7
      %v471 = vsub.s32 6, %v470
      %v472 = vrot.slane %v333, %v471
      %v473 = vlaneseq
      %v474 = vshrl.u32 %v473, 7
      %v475 = vsub.s32 6, %v474
      %v476 = vrot.slane %v334, %v475
      %479 = vrot.lane.b32.xlu0 %v472, 15
      %v480 = vpop.permute.xlu0 %479
      %481 = vrot.lane.b32.xlu0 %v476, 15
      %v482 = vpop.permute.xlu0 %481
      %vm483 = vcmask 121856
      %v484 = vsel %vm483, %v480, %v482
      %v488 = vmul.f32 %v444, %v480
      %v489 = vmul.f32 %v445, %v484
      %v490 = vmul.f32 %v446, %v482
      %v491 = vlaneseq
      %v492 = vshrl.u32 %v491, 7
      %v493 = vsub.s32 7, %v492
      %v494 = vrot.slane %v333, %v493
      %v495 = vlaneseq
      %v496 = vshrl.u32 %v495, 7
      %v497 = vsub.s32 7, %v496
      %v498 = vrot.slane %v334, %v497
      %501 = vrot.lane.b32.xlu0 %v494, 16
      %v502 = vpop.permute.xlu0 %501
      %503 = vrot.lane.b32.xlu0 %v498, 16
      %v504 = vpop.permute.xlu0 %503
      %vm505 = vcmask 130048
      %v506 = vsel %vm505, %v502, %v504
      %v510 = vmul.f32 %v444, %v502
      %v511 = vmul.f32 %v445, %v506
      %v512 = vmul.f32 %v446, %v504
      %v513 = vlaneseq
      %v514 = vshrl.u32 %v513, 7
      %v515 = vsub.s32 0, %v514
      %v516 = vrot.slane %v335, %v515
      %v517 = vlaneseq
      %v518 = vshrl.u32 %v517, 7
      %v519 = vsub.s32 0, %v518
      %v520 = vrot.slane %v336, %v519
      %523 = vrot.lane.b32.xlu0 %v516, 17
      %v524 = vpop.permute.xlu0 %523
      %525 = vrot.lane.b32.xlu0 %v520, 17
      %v526 = vpop.permute.xlu0 %525
      %vm527 = vcmask 138240
      %v528 = vsel %vm527, %v524, %v526
      %v532 = vmul.f32 %v444, %v524
      %v533 = vmul.f32 %v445, %v528
      %v534 = vmul.f32 %v446, %v526
      %538 = vrot.lane.b32.xlu0 %v397, 127
      %v539 = vpop.permute.xlu0 %538
      %540 = vrot.lane.b32.xlu0 %v398, 127
      %v541 = vpop.permute.xlu0 %540
      %542 = vrot.lane.b32.xlu0 %v399, 127
      %v543 = vpop.permute.xlu0 %542
      %v544 = vsel %vm436, %v539, %v541
      %v545 = vsel %vm436, %v541, %v543
      %549 = vrot.lane.b32.xlu0 %v419, 126
      %v550 = vpop.permute.xlu0 %549
      %551 = vrot.lane.b32.xlu0 %v420, 126
      %v552 = vpop.permute.xlu0 %551
      %553 = vrot.lane.b32.xlu0 %v421, 126
      %v554 = vpop.permute.xlu0 %553
      %vm555 = vcmask 1031168
      %v556 = vsel %vm555, %v550, %v552
      %v557 = vsel %vm555, %v552, %v554
      %561 = vrot.lane.b32.xlu0 %v441, 112
      %v562 = vpop.permute.xlu0 %561
      %563 = vrot.lane.b32.xlu0 %v442, 112
      %v564 = vpop.permute.xlu0 %563
      %565 = vrot.lane.b32.xlu0 %v443, 112
      %v566 = vpop.permute.xlu0 %565
      %v567 = vsel %vm392, %v562, %v564
      %v568 = vsel %vm392, %v564, %v566
      %571 = vrot.lane.b32.xlu0 %v354, 111
      %v572 = vpop.permute.xlu0 %571
      %573 = vrot.lane.b32.xlu0 %v355, 111
      %v574 = vpop.permute.xlu0 %573
      %v575 = vsel %vm370, %v572, %v574
      %579 = vrot.lane.b32.xlu0 %v466, 110
      %v580 = vpop.permute.xlu0 %579
      %581 = vrot.lane.b32.xlu0 %v467, 110
      %v582 = vpop.permute.xlu0 %581
      %583 = vrot.lane.b32.xlu0 %v468, 110
      %v584 = vpop.permute.xlu0 %583
      %vm585 = vcmask 900096
      %v586 = vsel %vm585, %v580, %v582
      %v587 = vsel %vm585, %v582, %v584
      %591 = vrot.lane.b32.xlu0 %v488, 96
      %v592 = vpop.permute.xlu0 %591
      %593 = vrot.lane.b32.xlu0 %v489, 96
      %v594 = vpop.permute.xlu0 %593
      %595 = vrot.lane.b32.xlu0 %v490, 96
      %v596 = vpop.permute.xlu0 %595
      %vm597 = vcmask 785408
      %v598 = vsel %vm597, %v592, %v594
      %v599 = vsel %vm597, %v594, %v596
      %603 = vrot.lane.b32.xlu0 %v510, 95
      %v604 = vpop.permute.xlu0 %603
      %605 = vrot.lane.b32.xlu0 %v511, 95
      %v606 = vpop.permute.xlu0 %605
      %607 = vrot.lane.b32.xlu0 %v512, 95
      %v608 = vpop.permute.xlu0 %607
      %vm609 = vcmask 777216
      %v610 = vsel %vm609, %v604, %v606
      %v611 = vsel %vm609, %v606, %v608
      %615 = vrot.lane.b32.xlu0 %v532, 94
      %v616 = vpop.permute.xlu0 %615
      %617 = vrot.lane.b32.xlu0 %v533, 94
      %v618 = vpop.permute.xlu0 %617
      %619 = vrot.lane.b32.xlu0 %v534, 94
      %v620 = vpop.permute.xlu0 %619
      %vm621 = vcmask 769024
      %v622 = vsel %vm621, %v616, %v618
      %v623 = vsel %vm621, %v618, %v620
      %v624 = vld [vmem:[%s3] sm:$0xff]
      %628 = vrot.lane.b32.xlu0 %v375, 17
      %v629 = vpop.permute.xlu0 %628
      %630 = vrot.lane.b32.xlu0 %v376, 17
      %v631 = vpop.permute.xlu0 %630
      %632 = vrot.lane.b32.xlu0 %v377, 17
      %v633 = vpop.permute.xlu0 %632
      %634 = vrot.lane.b32.xlu0 %v544, 17
      %v635 = vpop.permute.xlu0 %634
      %636 = vrot.lane.b32.xlu0 %v545, 17
      %v637 = vpop.permute.xlu0 %636
      %638 = vrot.lane.b32.xlu0 %v543, 17
      %v639 = vpop.permute.xlu0 %638
      %640 = vrot.lane.b32.xlu0 %v556, 17
      %v641 = vpop.permute.xlu0 %640
      %642 = vrot.lane.b32.xlu0 %v557, 17
      %v643 = vpop.permute.xlu0 %642
      %644 = vrot.lane.b32.xlu0 %v554, 17
      %v645 = vpop.permute.xlu0 %644
      %646 = vrot.lane.b32.xlu0 %v567, 17
      %v647 = vpop.permute.xlu0 %646
      %648 = vrot.lane.b32.xlu0 %v568, 17
      %v649 = vpop.permute.xlu0 %648
      %650 = vrot.lane.b32.xlu0 %v566, 17
      %v651 = vpop.permute.xlu0 %650
      %652 = vrot.lane.b32.xlu0 %v572, 17
      %v653 = vpop.permute.xlu0 %652
      %654 = vrot.lane.b32.xlu0 %v575, 17
      %v655 = vpop.permute.xlu0 %654
      %656 = vrot.lane.b32.xlu0 %v574, 17
      %v657 = vpop.permute.xlu0 %656
      %658 = vrot.lane.b32.xlu0 %v580, 17
      %v659 = vpop.permute.xlu0 %658
      %660 = vrot.lane.b32.xlu0 %v586, 17
      %v661 = vpop.permute.xlu0 %660
      %662 = vrot.lane.b32.xlu0 %v587, 17
      %v663 = vpop.permute.xlu0 %662
      %664 = vrot.lane.b32.xlu0 %v592, 17
      %v665 = vpop.permute.xlu0 %664
      %666 = vrot.lane.b32.xlu0 %v598, 17
      %v667 = vpop.permute.xlu0 %666
      %668 = vrot.lane.b32.xlu0 %v599, 17
      %v669 = vpop.permute.xlu0 %668
      %670 = vrot.lane.b32.xlu0 %v604, 17
      %v671 = vpop.permute.xlu0 %670
      %672 = vrot.lane.b32.xlu0 %v610, 17
      %v673 = vpop.permute.xlu0 %672
      %674 = vrot.lane.b32.xlu0 %v611, 17
      %v675 = vpop.permute.xlu0 %674
      %676 = vrot.lane.b32.xlu0 %v616, 17
      %v677 = vpop.permute.xlu0 %676
      %678 = vrot.lane.b32.xlu0 %v622, 17
      %v679 = vpop.permute.xlu0 %678
      %680 = vrot.lane.b32.xlu0 %v623, 17
      %v681 = vpop.permute.xlu0 %680
      %v682 = vsel %vm527, %v629, %v631
      %v683 = vsel %vm527, %v631, %v633
      %v684 = vsel %vm527, %v635, %v637
      %v685 = vsel %vm527, %v637, %v639
      %v686 = vsel %vm527, %v641, %v643
      %v687 = vsel %vm527, %v643, %v645
      %v688 = vsel %vm527, %v647, %v649
      %v689 = vsel %vm527, %v649, %v651
      %v690 = vsel %vm527, %v653, %v655
      %v691 = vsel %vm527, %v655, %v657
      %v692 = vsel %vm527, %v659, %v661
      %v693 = vsel %vm527, %v661, %v663
      %v694 = vsel %vm527, %v665, %v667
      %v695 = vsel %vm527, %v667, %v669
      %v696 = vsel %vm527, %v671, %v673
      %v697 = vsel %vm527, %v673, %v675
      %v698 = vsel %vm527, %v677, %v679
      %v699 = vsel %vm527, %v679, %v681
      %vm718 = vcmask 588800
      %v720 = vsel %vm718, %v624, 0
      %722 = vmatprep.subr.mxu0 0.0
      %723 = vmatpush1.msra.mxu0 0.0
      %724 = vmatprep.subr.mxu0 0.0
      %725 = vmatpush1.msra.mxu0 0.0
      %726 = vmatprep.subr.mxu0 0.0
      %727 = vmatpush1.msra.mxu0 0.0
      %728 = vmatprep.subr.mxu0 0.0
      %729 = vmatpush1.msra.mxu0 0.0
      %730 = vmatprep.subr.mxu0 0.0
      %731 = vmatpush1.msra.mxu0 0.0
      %732 = vmatprep.subr.mxu0 0.0
      %733 = vmatpush1.msra.mxu0 0.0
      %734 = vmatprep.subr.mxu0 0.0
      %735 = vmatpush1.msra.mxu0 0.0
      %736 = vmatprep.subr.mxu0 %v699
      %737 = vmatpush1.msra.mxu0 %v698
      %738 = vmatprep.subr.mxu0 %v697
      %739 = vmatpush1.msra.mxu0 %v696
      %740 = vmatprep.subr.mxu0 %v695
      %741 = vmatpush1.msra.mxu0 %v694
      %742 = vmatprep.subr.mxu0 %v693
      %743 = vmatpush1.msra.mxu0 %v692
      %744 = vmatprep.subr.mxu0 %v691
      %745 = vmatpush1.msra.mxu0 %v690
      %746 = vmatprep.subr.mxu0 %v689
      %747 = vmatpush1.msra.mxu0 %v688
      %748 = vmatprep.subr.mxu0 %v687
      %749 = vmatpush1.msra.mxu0 %v686
      %750 = vmatprep.subr.mxu0 %v685
      %751 = vmatpush1.msra.mxu0 %v684
      %752 = vmatprep.subr.mxu0 %v683
      %753 = vmatpush1.msra.mxu0 %v682
      %754 = vmatprep.subr.mxu0 0.0
      %755 = vmatpush2.msra.mxu0 0.0
      %756 = vmatprep.subr.mxu0 0.0
      %757 = vmatpush2.msra.mxu0 0.0
      %758 = vmatprep.subr.mxu0 0.0
      %759 = vmatpush2.msra.mxu0 0.0
      %760 = vmatprep.subr.mxu0 0.0
      %761 = vmatpush2.msra.mxu0 0.0
      %762 = vmatprep.subr.mxu0 0.0
      %763 = vmatpush2.msra.mxu0 0.0
      %764 = vmatprep.subr.mxu0 0.0
      %765 = vmatpush2.msra.mxu0 0.0
      %766 = vmatprep.subr.mxu0 0.0
      %767 = vmatpush2.msra.mxu0 0.0
      %768 = vmatprep.subr.mxu0 0.0
      %769 = vmatpush2.msra.mxu0 0.0
      %770 = vmatprep.subr.mxu0 0.0
      %771 = vmatpush2.msra.mxu0 0.0
      %772 = vmatprep.subr.mxu0 0.0
      %773 = vmatpush2.msra.mxu0 0.0
      %774 = vmatprep.subr.mxu0 0.0
      %775 = vmatpush2.msra.mxu0 0.0
      %776 = vmatprep.subr.mxu0 0.0
      %777 = vmatpush2.msra.mxu0 0.0
      %778 = vmatprep.subr.mxu0 0.0
      %779 = vmatpush2.msra.mxu0 0.0
      %780 = vmatprep.subr.mxu0 0.0
      %781 = vmatpush2.msra.mxu0 0.0
      %782 = vmatprep.subr.mxu0 0.0
      %783 = vmatpush2.msra.mxu0 0.0
      %784 = vmatprep.subr.mxu0 0.0
      %785 = vmatpush2.msra.mxu0 0.0
      %786 = vmatprep.mubr.f32.mxu0 0.0
      %787 = vmatmul.mubr.f32.gmra.mxu0 %v720
      %v788 = vpop.f32.mrf.mxu0
      %v789 = vadd.f32 0.0, %v788
      %v790 = vpop.f32.mrf.mxu0
      %v791 = vadd.f32 0.0, %v790
      %792 = vdwg.mxu0
      %793 = vst [vmem:[#allocation2 + $0x8] sm:$0xff] %v789
      %794 = vst [vmem:[#allocation2 + $0x10] sm:$0xff] %v791
      %v795 = vld [vmem:[#allocation2] sm:$0xff]
      %v796 = vld [vmem:[#allocation2 + $0x8] sm:$0xff]
      %v797 = vld [vmem:[#allocation2 + $0x10] sm:$0xff]
      %v798 = vmul.f32 %v795, %v367
      %v799 = vmul.f32 %v796, %v371
      %v800 = vmul.f32 %v797, %v369
      %v801 = vmul.f32 %v795, %v389
      %v802 = vmul.f32 %v796, %v393
      %v803 = vmul.f32 %v797, %v391
      %v804 = vmul.f32 %v795, %v411
      %v805 = vmul.f32 %v796, %v415
      %v806 = vmul.f32 %v797, %v413
      %v807 = vmul.f32 %v795, %v433
      %v808 = vmul.f32 %v796, %v437
      %v809 = vmul.f32 %v797, %v435
      %v810 = vld [vmem:[#allocation2 + $0x8] sm:$0xff]
      %v811 = vld [vmem:[#allocation2 + $0x10] sm:$0xff]
      %v812 = vld [vmem:[#allocation2 + $0x18] sm:$0xff]
      %v813 = vmul.f32 %v810, %v458
      %v814 = vmul.f32 %v811, %v462
      %v815 = vmul.f32 %v812, %v460
      %v816 = vmul.f32 %v810, %v480
      %v817 = vmul.f32 %v811, %v484
      %v818 = vmul.f32 %v812, %v482
      %v819 = vmul.f32 %v810, %v502
      %v820 = vmul.f32 %v811, %v506
      %v821 = vmul.f32 %v812, %v504
      %v822 = vmul.f32 %v810, %v524
      %v823 = vmul.f32 %v811, %v528
      %v824 = vmul.f32 %v812, %v526
      %828 = vrot.lane.b32.xlu0 %v801, 127
      %v829 = vpop.permute.xlu0 %828
      %830 = vrot.lane.b32.xlu0 %v802, 127
      %v831 = vpop.permute.xlu0 %830
      %832 = vrot.lane.b32.xlu0 %v803, 127
      %v833 = vpop.permute.xlu0 %832
      %v834 = vsel %vm436, %v829, %v831
      %v835 = vsel %vm436, %v831, %v833
      %839 = vrot.lane.b32.xlu0 %v804, 126
      %v840 = vpop.permute.xlu0 %839
      %841 = vrot.lane.b32.xlu0 %v805, 126
      %v842 = vpop.permute.xlu0 %841
      %843 = vrot.lane.b32.xlu0 %v806, 126
      %v844 = vpop.permute.xlu0 %843
      %v845 = vsel %vm555, %v840, %v842
      %v846 = vsel %vm555, %v842, %v844
      %850 = vrot.lane.b32.xlu0 %v807, 112
      %v851 = vpop.permute.xlu0 %850
      %852 = vrot.lane.b32.xlu0 %v808, 112
      %v853 = vpop.permute.xlu0 %852
      %854 = vrot.lane.b32.xlu0 %v809, 112
      %v855 = vpop.permute.xlu0 %854
      %v856 = vsel %vm392, %v851, %v853
      %v857 = vsel %vm392, %v853, %v855
      %860 = vrot.lane.b32.xlu0 %v796, 111
      %v861 = vpop.permute.xlu0 %860
      %862 = vrot.lane.b32.xlu0 %v797, 111
      %v863 = vpop.permute.xlu0 %862
      %v864 = vsel %vm370, %v861, %v863
      %868 = vrot.lane.b32.xlu0 %v813, 110
      %v869 = vpop.permute.xlu0 %868
      %870 = vrot.lane.b32.xlu0 %v814, 110
      %v871 = vpop.permute.xlu0 %870
      %872 = vrot.lane.b32.xlu0 %v815, 110
      %v873 = vpop.permute.xlu0 %872
      %v874 = vsel %vm585, %v869, %v871
      %v875 = vsel %vm585, %v871, %v873
      %879 = vrot.lane.b32.xlu0 %v816, 96
      %v880 = vpop.permute.xlu0 %879
      %881 = vrot.lane.b32.xlu0 %v817, 96
      %v882 = vpop.permute.xlu0 %881
      %883 = vrot.lane.b32.xlu0 %v818, 96
      %v884 = vpop.permute.xlu0 %883
      %v885 = vsel %vm597, %v880, %v882
      %v886 = vsel %vm597, %v882, %v884
      %890 = vrot.lane.b32.xlu0 %v819, 95
      %v891 = vpop.permute.xlu0 %890
      %892 = vrot.lane.b32.xlu0 %v820, 95
      %v893 = vpop.permute.xlu0 %892
      %894 = vrot.lane.b32.xlu0 %v821, 95
      %v895 = vpop.permute.xlu0 %894
      %v896 = vsel %vm609, %v891, %v893
      %v897 = vsel %vm609, %v893, %v895
      %901 = vrot.lane.b32.xlu0 %v822, 94
      %v902 = vpop.permute.xlu0 %901
      %903 = vrot.lane.b32.xlu0 %v823, 94
      %v904 = vpop.permute.xlu0 %903
      %905 = vrot.lane.b32.xlu0 %v824, 94
      %v906 = vpop.permute.xlu0 %905
      %v907 = vsel %vm621, %v902, %v904
      %v908 = vsel %vm621, %v904, %v906
      %v909 = vld [vmem:[%s4] sm:$0xff]
      %913 = vrot.lane.b32.xlu0 %v798, 17
      %v914 = vpop.permute.xlu0 %913
      %915 = vrot.lane.b32.xlu0 %v799, 17
      %v916 = vpop.permute.xlu0 %915
      %917 = vrot.lane.b32.xlu0 %v800, 17
      %v918 = vpop.permute.xlu0 %917
      %919 = vrot.lane.b32.xlu0 %v834, 17
      %v920 = vpop.permute.xlu0 %919
      %921 = vrot.lane.b32.xlu0 %v835, 17
      %v922 = vpop.permute.xlu0 %921
      %923 = vrot.lane.b32.xlu0 %v833, 17
      %v924 = vpop.permute.xlu0 %923
      %925 = vrot.lane.b32.xlu0 %v845, 17
      %v926 = vpop.permute.xlu0 %925
      %927 = vrot.lane.b32.xlu0 %v846, 17
      %v928 = vpop.permute.xlu0 %927
      %929 = vrot.lane.b32.xlu0 %v844, 17
      %v930 = vpop.permute.xlu0 %929
      %931 = vrot.lane.b32.xlu0 %v856, 17
      %v932 = vpop.permute.xlu0 %931
      %933 = vrot.lane.b32.xlu0 %v857, 17
      %v934 = vpop.permute.xlu0 %933
      %935 = vrot.lane.b32.xlu0 %v855, 17
      %v936 = vpop.permute.xlu0 %935
      %937 = vrot.lane.b32.xlu0 %v861, 17
      %v938 = vpop.permute.xlu0 %937
      %939 = vrot.lane.b32.xlu0 %v864, 17
      %v940 = vpop.permute.xlu0 %939
      %941 = vrot.lane.b32.xlu0 %v863, 17
      %v942 = vpop.permute.xlu0 %941
      %943 = vrot.lane.b32.xlu0 %v869, 17
      %v944 = vpop.permute.xlu0 %943
      %945 = vrot.lane.b32.xlu0 %v874, 17
      %v946 = vpop.permute.xlu0 %945
      %947 = vrot.lane.b32.xlu0 %v875, 17
      %v948 = vpop.permute.xlu0 %947
      %949 = vrot.lane.b32.xlu0 %v880, 17
      %v950 = vpop.permute.xlu0 %949
      %951 = vrot.lane.b32.xlu0 %v885, 17
      %v952 = vpop.permute.xlu0 %951
      %953 = vrot.lane.b32.xlu0 %v886, 17
      %v954 = vpop.permute.xlu0 %953
      %955 = vrot.lane.b32.xlu0 %v891, 17
      %v956 = vpop.permute.xlu0 %955
      %957 = vrot.lane.b32.xlu0 %v896, 17
      %v958 = vpop.permute.xlu0 %957
      %959 = vrot.lane.b32.xlu0 %v897, 17
      %v960 = vpop.permute.xlu0 %959
      %961 = vrot.lane.b32.xlu0 %v902, 17
      %v962 = vpop.permute.xlu0 %961
      %963 = vrot.lane.b32.xlu0 %v907, 17
      %v964 = vpop.permute.xlu0 %963
      %965 = vrot.lane.b32.xlu0 %v908, 17
      %v966 = vpop.permute.xlu0 %965
      %v967 = vsel %vm527, %v914, %v916
      %v968 = vsel %vm527, %v916, %v918
      %v969 = vsel %vm527, %v920, %v922
      %v970 = vsel %vm527, %v922, %v924
      %v971 = vsel %vm527, %v926, %v928
      %v972 = vsel %vm527, %v928, %v930
      %v973 = vsel %vm527, %v932, %v934
      %v974 = vsel %vm527, %v934, %v936
      %v975 = vsel %vm527, %v938, %v940
      %v976 = vsel %vm527, %v940, %v942
      %v977 = vsel %vm527, %v944, %v946
      %v978 = vsel %vm527, %v946, %v948
      %v979 = vsel %vm527, %v950, %v952
      %v980 = vsel %vm527, %v952, %v954
      %v981 = vsel %vm527, %v956, %v958
      %v982 = vsel %vm527, %v958, %v960
      %v983 = vsel %vm527, %v962, %v964
      %v984 = vsel %vm527, %v964, %v966
      %v1004 = vsel %vm718, %v909, 0
      %1006 = vmatprep.subr.mxu0 0.0
      %1007 = vmatpush1.msra.mxu0 0.0
      %1008 = vmatprep.subr.mxu0 0.0
      %1009 = vmatpush1.msra.mxu0 0.0
      %1010 = vmatprep.subr.mxu0 0.0
      %1011 = vmatpush1.msra.mxu0 0.0
      %1012 = vmatprep.subr.mxu0 0.0
      %1013 = vmatpush1.msra.mxu0 0.0
      %1014 = vmatprep.subr.mxu0 0.0
      %1015 = vmatpush1.msra.mxu0 0.0
      %1016 = vmatprep.subr.mxu0 0.0
      %1017 = vmatpush1.msra.mxu0 0.0
      %1018 = vmatprep.subr.mxu0 0.0
      %1019 = vmatpush1.msra.mxu0 0.0
      %1020 = vmatprep.subr.mxu0 %v984
      %1021 = vmatpush1.msra.mxu0 %v983
      %1022 = vmatprep.subr.mxu0 %v982
      %1023 = vmatpush1.msra.mxu0 %v981
      %1024 = vmatprep.subr.mxu0 %v980
      %1025 = vmatpush1.msra.mxu0 %v979
      %1026 = vmatprep.subr.mxu0 %v978
      %1027 = vmatpush1.msra.mxu0 %v977
      %1028 = vmatprep.subr.mxu0 %v976
      %1029 = vmatpush1.msra.mxu0 %v975
      %1030 = vmatprep.subr.mxu0 %v974
      %1031 = vmatpush1.msra.mxu0 %v973
      %1032 = vmatprep.subr.mxu0 %v972
      %1033 = vmatpush1.msra.mxu0 %v971
      %1034 = vmatprep.subr.mxu0 %v970
      %1035 = vmatpush1.msra.mxu0 %v969
      %1036 = vmatprep.subr.mxu0 %v968
      %1037 = vmatpush1.msra.mxu0 %v967
      %1038 = vmatprep.subr.mxu0 0.0
      %1039 = vmatpush2.msra.mxu0 0.0
      %1040 = vmatprep.subr.mxu0 0.0
      %1041 = vmatpush2.msra.mxu0 0.0
      %1042 = vmatprep.subr.mxu0 0.0
      %1043 = vmatpush2.msra.mxu0 0.0
      %1044 = vmatprep.subr.mxu0 0.0
      %1045 = vmatpush2.msra.mxu0 0.0
      %1046 = vmatprep.subr.mxu0 0.0
      %1047 = vmatpush2.msra.mxu0 0.0
      %1048 = vmatprep.subr.mxu0 0.0
      %1049 = vmatpush2.msra.mxu0 0.0
      %1050 = vmatprep.subr.mxu0 0.0
      %1051 = vmatpush2.msra.mxu0 0.0
      %1052 = vmatprep.subr.mxu0 0.0
      %1053 = vmatpush2.msra.mxu0 0.0
      %1054 = vmatprep.subr.mxu0 0.0
      %1055 = vmatpush2.msra.mxu0 0.0
      %1056 = vmatprep.subr.mxu0 0.0
      %1057 = vmatpush2.msra.mxu0 0.0
      %1058 = vmatprep.subr.mxu0 0.0
      %1059 = vmatpush2.msra.mxu0 0.0
      %1060 = vmatprep.subr.mxu0 0.0
      %1061 = vmatpush2.msra.mxu0 0.0
      %1062 = vmatprep.subr.mxu0 0.0
      %1063 = vmatpush2.msra.mxu0 0.0
      %1064 = vmatprep.subr.mxu0 0.0
      %1065 = vmatpush2.msra.mxu0 0.0
      %1066 = vmatprep.subr.mxu0 0.0
      %1067 = vmatpush2.msra.mxu0 0.0
      %1068 = vmatprep.subr.mxu0 0.0
      %1069 = vmatpush2.msra.mxu0 0.0
      %1070 = vmatprep.mubr.f32.mxu0 0.0
      %1071 = vmatmul.mubr.f32.gmra.mxu0 %v1004
      %v1072 = vpop.f32.mrf.mxu0
      %v1073 = vadd.f32 0.0, %v1072
      %v1074 = vpop.f32.mrf.mxu0
      %v1075 = vadd.f32 0.0, %v1074
      %1076 = vdwg.mxu0
      %v1077 = vmax.f32 %v1073, 0.0
      %v1078 = vmax.f32 %v1075, 0.0
      %1079 = vst [vmem:[#allocation2 + $0x8] sm:$0xff] %v1077
      %1080 = vst [vmem:[#allocation2 + $0x10] sm:$0xff] %v1078
      %v1081 = vld [vmem:[#allocation2] sm:$0xff]
      %v1082 = vld [vmem:[#allocation2 + $0x8] sm:$0xff]
      %v1083 = vld [vmem:[#allocation2 + $0x10] sm:$0xff]
      %v1084 = vmul.f32 %v1081, %v367
      %v1085 = vmul.f32 %v1082, %v371
      %v1086 = vmul.f32 %v1083, %v369
      %v1087 = vmul.f32 %v1081, %v389
      %v1088 = vmul.f32 %v1082, %v393
      %v1089 = vmul.f32 %v1083, %v391
      %v1090 = vmul.f32 %v1081, %v411
      %v1091 = vmul.f32 %v1082, %v415
      %v1092 = vmul.f32 %v1083, %v413
      %v1093 = vmul.f32 %v1081, %v433
      %v1094 = vmul.f32 %v1082, %v437
      %v1095 = vmul.f32 %v1083, %v435
      %v1096 = vld [vmem:[#allocation2 + $0x8] sm:$0xff]
      %v1097 = vld [vmem:[#allocation2 + $0x10] sm:$0xff]
      %v1098 = vld [vmem:[#allocation2 + $0x18] sm:$0xff]
      %v1099 = vmul.f32 %v1096, %v458
      %v1100 = vmul.f32 %v1097, %v462
      %v1101 = vmul.f32 %v1098, %v460
      %v1102 = vmul.f32 %v1096, %v480
      %v1103 = vmul.f32 %v1097, %v484
      %v1104 = vmul.f32 %v1098, %v482
      %v1105 = vmul.f32 %v1096, %v502
      %v1106 = vmul.f32 %v1097, %v506
      %v1107 = vmul.f32 %v1098, %v504
      %v1108 = vmul.f32 %v1096, %v524
      %v1109 = vmul.f32 %v1097, %v528
      %v1110 = vmul.f32 %v1098, %v526
      %1114 = vrot.lane.b32.xlu0 %v1087, 127
      %v1115 = vpop.permute.xlu0 %1114
      %1116 = vrot.lane.b32.xlu0 %v1088, 127
      %v1117 = vpop.permute.xlu0 %1116
      %1118 = vrot.lane.b32.xlu0 %v1089, 127
      %v1119 = vpop.permute.xlu0 %1118
      %v1120 = vsel %vm436, %v1115, %v1117
      %v1121 = vsel %vm436, %v1117, %v1119
      %1125 = vrot.lane.b32.xlu0 %v1090, 126
      %v1126 = vpop.permute.xlu0 %1125
      %1127 = vrot.lane.b32.xlu0 %v1091, 126
      %v1128 = vpop.permute.xlu0 %1127
      %1129 = vrot.lane.b32.xlu0 %v1092, 126
      %v1130 = vpop.permute.xlu0 %1129
      %v1131 = vsel %vm555, %v1126, %v1128
      %v1132 = vsel %vm555, %v1128, %v1130
      %1136 = vrot.lane.b32.xlu0 %v1093, 112
      %v1137 = vpop.permute.xlu0 %1136
      %1138 = vrot.lane.b32.xlu0 %v1094, 112
      %v1139 = vpop.permute.xlu0 %1138
      %1140 = vrot.lane.b32.xlu0 %v1095, 112
      %v1141 = vpop.permute.xlu0 %1140
      %v1142 = vsel %vm392, %v1137, %v1139
      %v1143 = vsel %vm392, %v1139, %v1141
      %1146 = vrot.lane.b32.xlu0 %v1082, 111
      %v1147 = vpop.permute.xlu0 %1146
      %1148 = vrot.lane.b32.xlu0 %v1083, 111
      %v1149 = vpop.permute.xlu0 %1148
      %v1150 = vsel %vm370, %v1147, %v1149
      %1154 = vrot.lane.b32.xlu0 %v1099, 110
      %v1155 = vpop.permute.xlu0 %1154
      %1156 = vrot.lane.b32.xlu0 %v1100, 110
      %v1157 = vpop.permute.xlu0 %1156
      %1158 = vrot.lane.b32.xlu0 %v1101, 110
      %v1159 = vpop.permute.xlu0 %1158
      %v1160 = vsel %vm585, %v1155, %v1157
      %v1161 = vsel %vm585, %v1157, %v1159
      %1165 = vrot.lane.b32.xlu0 %v1102, 96
      %v1166 = vpop.permute.xlu0 %1165
      %1167 = vrot.lane.b32.xlu0 %v1103, 96
      %v1168 = vpop.permute.xlu0 %1167
      %1169 = vrot.lane.b32.xlu0 %v1104, 96
      %v1170 = vpop.permute.xlu0 %1169
      %v1171 = vsel %vm597, %v1166, %v1168
      %v1172 = vsel %vm597, %v1168, %v1170
      %1176 = vrot.lane.b32.xlu0 %v1105, 95
      %v1177 = vpop.permute.xlu0 %1176
      %1178 = vrot.lane.b32.xlu0 %v1106, 95
      %v1179 = vpop.permute.xlu0 %1178
      %1180 = vrot.lane.b32.xlu0 %v1107, 95
      %v1181 = vpop.permute.xlu0 %1180
      %v1182 = vsel %vm609, %v1177, %v1179
      %v1183 = vsel %vm609, %v1179, %v1181
      %1187 = vrot.lane.b32.xlu0 %v1108, 94
      %v1188 = vpop.permute.xlu0 %1187
      %1189 = vrot.lane.b32.xlu0 %v1109, 94
      %v1190 = vpop.permute.xlu0 %1189
      %1191 = vrot.lane.b32.xlu0 %v1110, 94
      %v1192 = vpop.permute.xlu0 %1191
      %v1193 = vsel %vm621, %v1188, %v1190
      %v1194 = vsel %vm621, %v1190, %v1192
      %v1195 = vld [vmem:[%s5] sm:$0xff]
      %1199 = vrot.lane.b32.xlu0 %v1084, 17
      %v1200 = vpop.permute.xlu0 %1199
      %1201 = vrot.lane.b32.xlu0 %v1085, 17
      %v1202 = vpop.permute.xlu0 %1201
      %1203 = vrot.lane.b32.xlu0 %v1086, 17
      %v1204 = vpop.permute.xlu0 %1203
      %1205 = vrot.lane.b32.xlu0 %v1120, 17
      %v1206 = vpop.permute.xlu0 %1205
      %1207 = vrot.lane.b32.xlu0 %v1121, 17
      %v1208 = vpop.permute.xlu0 %1207
      %1209 = vrot.lane.b32.xlu0 %v1119, 17
      %v1210 = vpop.permute.xlu0 %1209
      %1211 = vrot.lane.b32.xlu0 %v1131, 17
      %v1212 = vpop.permute.xlu0 %1211
      %1213 = vrot.lane.b32.xlu0 %v1132, 17
      %v1214 = vpop.permute.xlu0 %1213
      %1215 = vrot.lane.b32.xlu0 %v1130, 17
      %v1216 = vpop.permute.xlu0 %1215
      %1217 = vrot.lane.b32.xlu0 %v1142, 17
      %v1218 = vpop.permute.xlu0 %1217
      %1219 = vrot.lane.b32.xlu0 %v1143, 17
      %v1220 = vpop.permute.xlu0 %1219
      %1221 = vrot.lane.b32.xlu0 %v1141, 17
      %v1222 = vpop.permute.xlu0 %1221
      %1223 = vrot.lane.b32.xlu0 %v1147, 17
      %v1224 = vpop.permute.xlu0 %1223
      %1225 = vrot.lane.b32.xlu0 %v1150, 17
      %v1226 = vpop.permute.xlu0 %1225
      %1227 = vrot.lane.b32.xlu0 %v1149, 17
      %v1228 = vpop.permute.xlu0 %1227
      %1229 = vrot.lane.b32.xlu0 %v1155, 17
      %v1230 = vpop.permute.xlu0 %1229
      %1231 = vrot.lane.b32.xlu0 %v1160, 17
      %v1232 = vpop.permute.xlu0 %1231
      %1233 = vrot.lane.b32.xlu0 %v1161, 17
      %v1234 = vpop.permute.xlu0 %1233
      %1235 = vrot.lane.b32.xlu0 %v1166, 17
      %v1236 = vpop.permute.xlu0 %1235
      %1237 = vrot.lane.b32.xlu0 %v1171, 17
      %v1238 = vpop.permute.xlu0 %1237
      %1239 = vrot.lane.b32.xlu0 %v1172, 17
      %v1240 = vpop.permute.xlu0 %1239
      %1241 = vrot.lane.b32.xlu0 %v1177, 17
      %v1242 = vpop.permute.xlu0 %1241
      %1243 = vrot.lane.b32.xlu0 %v1182, 17
      %v1244 = vpop.permute.xlu0 %1243
      %1245 = vrot.lane.b32.xlu0 %v1183, 17
      %v1246 = vpop.permute.xlu0 %1245
      %1247 = vrot.lane.b32.xlu0 %v1188, 17
      %v1248 = vpop.permute.xlu0 %1247
      %1249 = vrot.lane.b32.xlu0 %v1193, 17
      %v1250 = vpop.permute.xlu0 %1249
      %1251 = vrot.lane.b32.xlu0 %v1194, 17
      %v1252 = vpop.permute.xlu0 %1251
      %v1253 = vsel %vm527, %v1200, %v1202
      %v1254 = vsel %vm527, %v1202, %v1204
      %v1255 = vsel %vm527, %v1206, %v1208
      %v1256 = vsel %vm527, %v1208, %v1210
      %v1257 = vsel %vm527, %v1212, %v1214
      %v1258 = vsel %vm527, %v1214, %v1216
      %v1259 = vsel %vm527, %v1218, %v1220
      %v1260 = vsel %vm527, %v1220, %v1222
      %v1261 = vsel %vm527, %v1224, %v1226
      %v1262 = vsel %vm527, %v1226, %v1228
      %v1263 = vsel %vm527, %v1230, %v1232
      %v1264 = vsel %vm527, %v1232, %v1234
      %v1265 = vsel %vm527, %v1236, %v1238
      %v1266 = vsel %vm527, %v1238, %v1240
      %v1267 = vsel %vm527, %v1242, %v1244
      %v1268 = vsel %vm527, %v1244, %v1246
      %v1269 = vsel %vm527, %v1248, %v1250
      %v1270 = vsel %vm527, %v1250, %v1252
      %v1290 = vsel %vm718, %v1195, 0
      %1292 = vmatprep.subr.mxu0 0.0
      %1293 = vmatpush1.msra.mxu0 0.0
      %1294 = vmatprep.subr.mxu0 0.0
      %1295 = vmatpush1.msra.mxu0 0.0
      %1296 = vmatprep.subr.mxu0 0.0
      %1297 = vmatpush1.msra.mxu0 0.0
      %1298 = vmatprep.subr.mxu0 0.0
      %1299 = vmatpush1.msra.mxu0 0.0
      %1300 = vmatprep.subr.mxu0 0.0
      %1301 = vmatpush1.msra.mxu0 0.0
      %1302 = vmatprep.subr.mxu0 0.0
      %1303 = vmatpush1.msra.mxu0 0.0
      %1304 = vmatprep.subr.mxu0 0.0
      %1305 = vmatpush1.msra.mxu0 0.0
      %1306 = vmatprep.subr.mxu0 %v1270
      %1307 = vmatpush1.msra.mxu0 %v1269
      %1308 = vmatprep.subr.mxu0 %v1268
      %1309 = vmatpush1.msra.mxu0 %v1267
      %1310 = vmatprep.subr.mxu0 %v1266
      %1311 = vmatpush1.msra.mxu0 %v1265
      %1312 = vmatprep.subr.mxu0 %v1264
      %1313 = vmatpush1.msra.mxu0 %v1263
      %1314 = vmatprep.subr.mxu0 %v1262
      %1315 = vmatpush1.msra.mxu0 %v1261
      %1316 = vmatprep.subr.mxu0 %v1260
      %1317 = vmatpush1.msra.mxu0 %v1259
      %1318 = vmatprep.subr.mxu0 %v1258
      %1319 = vmatpush1.msra.mxu0 %v1257
      %1320 = vmatprep.subr.mxu0 %v1256
      %1321 = vmatpush1.msra.mxu0 %v1255
      %1322 = vmatprep.subr.mxu0 %v1254
      %1323 = vmatpush1.msra.mxu0 %v1253
      %1324 = vmatprep.subr.mxu0 0.0
      %1325 = vmatpush2.msra.mxu0 0.0
      %1326 = vmatprep.subr.mxu0 0.0
      %1327 = vmatpush2.msra.mxu0 0.0
      %1328 = vmatprep.subr.mxu0 0.0
      %1329 = vmatpush2.msra.mxu0 0.0
      %1330 = vmatprep.subr.mxu0 0.0
      %1331 = vmatpush2.msra.mxu0 0.0
      %1332 = vmatprep.subr.mxu0 0.0
      %1333 = vmatpush2.msra.mxu0 0.0
      %1334 = vmatprep.subr.mxu0 0.0
      %1335 = vmatpush2.msra.mxu0 0.0
      %1336 = vmatprep.subr.mxu0 0.0
      %1337 = vmatpush2.msra.mxu0 0.0
      %1338 = vmatprep.subr.mxu0 0.0
      %1339 = vmatpush2.msra.mxu0 0.0
      %1340 = vmatprep.subr.mxu0 0.0
      %1341 = vmatpush2.msra.mxu0 0.0
      %1342 = vmatprep.subr.mxu0 0.0
      %1343 = vmatpush2.msra.mxu0 0.0
      %1344 = vmatprep.subr.mxu0 0.0
      %1345 = vmatpush2.msra.mxu0 0.0
      %1346 = vmatprep.subr.mxu0 0.0
      %1347 = vmatpush2.msra.mxu0 0.0
      %1348 = vmatprep.subr.mxu0 0.0
      %1349 = vmatpush2.msra.mxu0 0.0
      %1350 = vmatprep.subr.mxu0 0.0
      %1351 = vmatpush2.msra.mxu0 0.0
      %1352 = vmatprep.subr.mxu0 0.0
      %1353 = vmatpush2.msra.mxu0 0.0
      %1354 = vmatprep.subr.mxu0 0.0
      %1355 = vmatpush2.msra.mxu0 0.0
      %1356 = vmatprep.mubr.f32.mxu0 0.0
      %1357 = vmatmul.mubr.f32.gmra.mxu0 %v1290
      %v1358 = vpop.f32.mrf.mxu0
      %v1359 = vadd.f32 0.0, %v1358
      %v1360 = vpop.f32.mrf.mxu0
      %v1361 = vadd.f32 0.0, %v1360
      %1362 = vdwg.mxu0
      %v1363 = vadd.f32 %v789, %v1359
      %v1364 = vadd.f32 %v791, %v1361
      %1365 = vst [vmem:[#allocation2 + $0x8] sm:$0xff] %v1363
      %1366 = vst [vmem:[#allocation2 + $0x10] sm:$0xff] %v1364
      %v1367 = vld [vmem:[#allocation2] sm:$0xff]
      %v1368 = vld [vmem:[#allocation2 + $0x8] sm:$0xff]
      %v1369 = vld [vmem:[#allocation2 + $0x10] sm:$0xff]
      %v1370 = vmul.f32 %v1367, %v367
      %v1371 = vmul.f32 %v1368, %v371
      %v1372 = vmul.f32 %v1369, %v369
      %v1373 = vmul.f32 %v1367, %v389
      %v1374 = vmul.f32 %v1368, %v393
      %v1375 = vmul.f32 %v1369, %v391
      %v1376 = vmul.f32 %v1367, %v411
      %v1377 = vmul.f32 %v1368, %v415
      %v1378 = vmul.f32 %v1369, %v413
      %v1379 = vmul.f32 %v1367, %v433
      %v1380 = vmul.f32 %v1368, %v437
      %v1381 = vmul.f32 %v1369, %v435
      %v1382 = vld [vmem:[#allocation2 + $0x8] sm:$0xff]
      %v1383 = vld [vmem:[#allocation2 + $0x10] sm:$0xff]
      %v1384 = vld [vmem:[#allocation2 + $0x18] sm:$0xff]
      %v1385 = vmul.f32 %v1382, %v458
      %v1386 = vmul.f32 %v1383, %v462
      %v1387 = vmul.f32 %v1384, %v460
      %v1388 = vmul.f32 %v1382, %v480
      %v1389 = vmul.f32 %v1383, %v484
      %v1390 = vmul.f32 %v1384, %v482
      %v1391 = vmul.f32 %v1382, %v502
      %v1392 = vmul.f32 %v1383, %v506
      %v1393 = vmul.f32 %v1384, %v504
      %v1394 = vmul.f32 %v1382, %v524
      %v1395 = vmul.f32 %v1383, %v528
      %v1396 = vmul.f32 %v1384, %v526
      %1400 = vrot.lane.b32.xlu0 %v1373, 127
      %v1401 = vpop.permute.xlu0 %1400
      %1402 = vrot.lane.b32.xlu0 %v1374, 127
      %v1403 = vpop.permute.xlu0 %1402
      %1404 = vrot.lane.b32.xlu0 %v1375, 127
      %v1405 = vpop.permute.xlu0 %1404
      %v1406 = vsel %vm436, %v1401, %v1403
      %v1407 = vsel %vm436, %v1403, %v1405
      %1411 = vrot.lane.b32.xlu0 %v1376, 126
      %v1412 = vpop.permute.xlu0 %1411
      %1413 = vrot.lane.b32.xlu0 %v1377, 126
      %v1414 = vpop.permute.xlu0 %1413
      %1415 = vrot.lane.b32.xlu0 %v1378, 126
      %v1416 = vpop.permute.xlu0 %1415
      %v1417 = vsel %vm555, %v1412, %v1414
      %v1418 = vsel %vm555, %v1414, %v1416
      %1422 = vrot.lane.b32.xlu0 %v1379, 112
      %v1423 = vpop.permute.xlu0 %1422
      %1424 = vrot.lane.b32.xlu0 %v1380, 112
      %v1425 = vpop.permute.xlu0 %1424
      %1426 = vrot.lane.b32.xlu0 %v1381, 112
      %v1427 = vpop.permute.xlu0 %1426
      %v1428 = vsel %vm392, %v1423, %v1425
      %v1429 = vsel %vm392, %v1425, %v1427
      %1432 = vrot.lane.b32.xlu0 %v1368, 111
      %v1433 = vpop.permute.xlu0 %1432
      %1434 = vrot.lane.b32.xlu0 %v1369, 111
      %v1435 = vpop.permute.xlu0 %1434
      %v1436 = vsel %vm370, %v1433, %v1435
      %1440 = vrot.lane.b32.xlu0 %v1385, 110
      %v1441 = vpop.permute.xlu0 %1440
      %1442 = vrot.lane.b32.xlu0 %v1386, 110
      %v1443 = vpop.permute.xlu0 %1442
      %1444 = vrot.lane.b32.xlu0 %v1387, 110
      %v1445 = vpop.permute.xlu0 %1444
      %v1446 = vsel %vm585, %v1441, %v1443
      %v1447 = vsel %vm585, %v1443, %v1445
      %1451 = vrot.lane.b32.xlu0 %v1388, 96
      %v1452 = vpop.permute.xlu0 %1451
      %1453 = vrot.lane.b32.xlu0 %v1389, 96
      %v1454 = vpop.permute.xlu0 %1453
      %1455 = vrot.lane.b32.xlu0 %v1390, 96
      %v1456 = vpop.permute.xlu0 %1455
      %v1457 = vsel %vm597, %v1452, %v1454
      %v1458 = vsel %vm597, %v1454, %v1456
      %1462 = vrot.lane.b32.xlu0 %v1391, 95
      %v1463 = vpop.permute.xlu0 %1462
      %1464 = vrot.lane.b32.xlu0 %v1392, 95
      %v1465 = vpop.permute.xlu0 %1464
      %1466 = vrot.lane.b32.xlu0 %v1393, 95
      %v1467 = vpop.permute.xlu0 %1466
      %v1468 = vsel %vm609, %v1463, %v1465
      %v1469 = vsel %vm609, %v1465, %v1467
      %1473 = vrot.lane.b32.xlu0 %v1394, 94
      %v1474 = vpop.permute.xlu0 %1473
      %1475 = vrot.lane.b32.xlu0 %v1395, 94
      %v1476 = vpop.permute.xlu0 %1475
      %1477 = vrot.lane.b32.xlu0 %v1396, 94
      %v1478 = vpop.permute.xlu0 %1477
      %v1479 = vsel %vm621, %v1474, %v1476
      %v1480 = vsel %vm621, %v1476, %v1478
      %v1481 = vld [vmem:[%s6] sm:$0xff]
      %1485 = vrot.lane.b32.xlu0 %v1370, 17
      %v1486 = vpop.permute.xlu0 %1485
      %1487 = vrot.lane.b32.xlu0 %v1371, 17
      %v1488 = vpop.permute.xlu0 %1487
      %1489 = vrot.lane.b32.xlu0 %v1372, 17
      %v1490 = vpop.permute.xlu0 %1489
      %1491 = vrot.lane.b32.xlu0 %v1406, 17
      %v1492 = vpop.permute.xlu0 %1491
      %1493 = vrot.lane.b32.xlu0 %v1407, 17
      %v1494 = vpop.permute.xlu0 %1493
      %1495 = vrot.lane.b32.xlu0 %v1405, 17
      %v1496 = vpop.permute.xlu0 %1495
      %1497 = vrot.lane.b32.xlu0 %v1417, 17
      %v1498 = vpop.permute.xlu0 %1497
      %1499 = vrot.lane.b32.xlu0 %v1418, 17
      %v1500 = vpop.permute.xlu0 %1499
      %1501 = vrot.lane.b32.xlu0 %v1416, 17
      %v1502 = vpop.permute.xlu0 %1501
      %1503 = vrot.lane.b32.xlu0 %v1428, 17
      %v1504 = vpop.permute.xlu0 %1503
      %1505 = vrot.lane.b32.xlu0 %v1429, 17
      %v1506 = vpop.permute.xlu0 %1505
      %1507 = vrot.lane.b32.xlu0 %v1427, 17
      %v1508 = vpop.permute.xlu0 %1507
      %1509 = vrot.lane.b32.xlu0 %v1433, 17
      %v1510 = vpop.permute.xlu0 %1509
      %1511 = vrot.lane.b32.xlu0 %v1436, 17
      %v1512 = vpop.permute.xlu0 %1511
      %1513 = vrot.lane.b32.xlu0 %v1435, 17
      %v1514 = vpop.permute.xlu0 %1513
      %1515 = vrot.lane.b32.xlu0 %v1441, 17
      %v1516 = vpop.permute.xlu0 %1515
      %1517 = vrot.lane.b32.xlu0 %v1446, 17
      %v1518 = vpop.permute.xlu0 %1517
      %1519 = vrot.lane.b32.xlu0 %v1447, 17
      %v1520 = vpop.permute.xlu0 %1519
      %1521 = vrot.lane.b32.xlu0 %v1452, 17
      %v1522 = vpop.permute.xlu0 %1521
      %1523 = vrot.lane.b32.xlu0 %v1457, 17
      %v1524 = vpop.permute.xlu0 %1523
      %1525 = vrot.lane.b32.xlu0 %v1458, 17
      %v1526 = vpop.permute.xlu0 %1525
      %1527 = vrot.lane.b32.xlu0 %v1463, 17
      %v1528 = vpop.permute.xlu0 %1527
      %1529 = vrot.lane.b32.xlu0 %v1468, 17
      %v1530 = vpop.permute.xlu0 %1529
      %1531 = vrot.lane.b32.xlu0 %v1469, 17
      %v1532 = vpop.permute.xlu0 %1531
      %1533 = vrot.lane.b32.xlu0 %v1474, 17
      %v1534 = vpop.permute.xlu0 %1533
      %1535 = vrot.lane.b32.xlu0 %v1479, 17
      %v1536 = vpop.permute.xlu0 %1535
      %1537 = vrot.lane.b32.xlu0 %v1480, 17
      %v1538 = vpop.permute.xlu0 %1537
      %v1539 = vsel %vm527, %v1486, %v1488
      %v1540 = vsel %vm527, %v1488, %v1490
      %v1541 = vsel %vm527, %v1492, %v1494
      %v1542 = vsel %vm527, %v1494, %v1496
      %v1543 = vsel %vm527, %v1498, %v1500
      %v1544 = vsel %vm527, %v1500, %v1502
      %v1545 = vsel %vm527, %v1504, %v1506
      %v1546 = vsel %vm527, %v1506, %v1508
      %v1547 = vsel %vm527, %v1510, %v1512
      %v1548 = vsel %vm527, %v1512, %v1514
      %v1549 = vsel %vm527, %v1516, %v1518
      %v1550 = vsel %vm527, %v1518, %v1520
      %v1551 = vsel %vm527, %v1522, %v1524
      %v1552 = vsel %vm527, %v1524, %v1526
      %v1553 = vsel %vm527, %v1528, %v1530
      %v1554 = vsel %vm527, %v1530, %v1532
      %v1555 = vsel %vm527, %v1534, %v1536
      %v1556 = vsel %vm527, %v1536, %v1538
      %v1576 = vsel %vm718, %v1481, 0
      %1578 = vmatprep.subr.mxu0 0.0
      %1579 = vmatpush1.msra.mxu0 0.0
      %1580 = vmatprep.subr.mxu0 0.0
      %1581 = vmatpush1.msra.mxu0 0.0
      %1582 = vmatprep.subr.mxu0 0.0
      %1583 = vmatpush1.msra.mxu0 0.0
      %1584 = vmatprep.subr.mxu0 0.0
      %1585 = vmatpush1.msra.mxu0 0.0
      %1586 = vmatprep.subr.mxu0 0.0
      %1587 = vmatpush1.msra.mxu0 0.0
      %1588 = vmatprep.subr.mxu0 0.0
      %1589 = vmatpush1.msra.mxu0 0.0
      %1590 = vmatprep.subr.mxu0 0.0
      %1591 = vmatpush1.msra.mxu0 0.0
      %1592 = vmatprep.subr.mxu0 %v1556
      %1593 = vmatpush1.msra.mxu0 %v1555
      %1594 = vmatprep.subr.mxu0 %v1554
      %1595 = vmatpush1.msra.mxu0 %v1553
      %1596 = vmatprep.subr.mxu0 %v1552
      %1597 = vmatpush1.msra.mxu0 %v1551
      %1598 = vmatprep.subr.mxu0 %v1550
      %1599 = vmatpush1.msra.mxu0 %v1549
      %1600 = vmatprep.subr.mxu0 %v1548
      %1601 = vmatpush1.msra.mxu0 %v1547
      %1602 = vmatprep.subr.mxu0 %v1546
      %1603 = vmatpush1.msra.mxu0 %v1545
      %1604 = vmatprep.subr.mxu0 %v1544
      %1605 = vmatpush1.msra.mxu0 %v1543
      %1606 = vmatprep.subr.mxu0 %v1542
      %1607 = vmatpush1.msra.mxu0 %v1541
      %1608 = vmatprep.subr.mxu0 %v1540
      %1609 = vmatpush1.msra.mxu0 %v1539
      %1610 = vmatprep.subr.mxu0 0.0
      %1611 = vmatpush2.msra.mxu0 0.0
      %1612 = vmatprep.subr.mxu0 0.0
      %1613 = vmatpush2.msra.mxu0 0.0
      %1614 = vmatprep.subr.mxu0 0.0
      %1615 = vmatpush2.msra.mxu0 0.0
      %1616 = vmatprep.subr.mxu0 0.0
      %1617 = vmatpush2.msra.mxu0 0.0
      %1618 = vmatprep.subr.mxu0 0.0
      %1619 = vmatpush2.msra.mxu0 0.0
      %1620 = vmatprep.subr.mxu0 0.0
      %1621 = vmatpush2.msra.mxu0 0.0
      %1622 = vmatprep.subr.mxu0 0.0
      %1623 = vmatpush2.msra.mxu0 0.0
      %1624 = vmatprep.subr.mxu0 0.0
      %1625 = vmatpush2.msra.mxu0 0.0
      %1626 = vmatprep.subr.mxu0 0.0
      %1627 = vmatpush2.msra.mxu0 0.0
      %1628 = vmatprep.subr.mxu0 0.0
      %1629 = vmatpush2.msra.mxu0 0.0
      %1630 = vmatprep.subr.mxu0 0.0
      %1631 = vmatpush2.msra.mxu0 0.0
      %1632 = vmatprep.subr.mxu0 0.0
      %1633 = vmatpush2.msra.mxu0 0.0
      %1634 = vmatprep.subr.mxu0 0.0
      %1635 = vmatpush2.msra.mxu0 0.0
      %1636 = vmatprep.subr.mxu0 0.0
      %1637 = vmatpush2.msra.mxu0 0.0
      %1638 = vmatprep.subr.mxu0 0.0
      %1639 = vmatpush2.msra.mxu0 0.0
      %1640 = vmatprep.subr.mxu0 0.0
      %1641 = vmatpush2.msra.mxu0 0.0
      %1642 = vmatprep.mubr.f32.mxu0 0.0
      %1643 = vmatmul.mubr.f32.gmra.mxu0 %v1576
      %v1644 = vpop.f32.mrf.mxu0
      %v1645 = vadd.f32 0.0, %v1644
      %v1646 = vpop.f32.mrf.mxu0
      %v1647 = vadd.f32 0.0, %v1646
      %1648 = vdwg.mxu0
      %v1649 = vmax.f32 %v1645, 0.0
      %v1650 = vmax.f32 %v1647, 0.0
      %1651 = vst [vmem:[#allocation2 + $0x8] sm:$0xff] %v1649
      %1652 = vst [vmem:[#allocation2 + $0x10] sm:$0xff] %v1650
      %v1653 = vld [vmem:[#allocation2] sm:$0xff]
      %v1654 = vld [vmem:[#allocation2 + $0x8] sm:$0xff]
      %v1655 = vld [vmem:[#allocation2 + $0x10] sm:$0xff]
      %v1656 = vmul.f32 %v1653, %v367
      %v1657 = vmul.f32 %v1654, %v371
      %v1658 = vmul.f32 %v1655, %v369
      %v1659 = vmul.f32 %v1653, %v389
      %v1660 = vmul.f32 %v1654, %v393
      %v1661 = vmul.f32 %v1655, %v391
      %v1662 = vmul.f32 %v1653, %v411
      %v1663 = vmul.f32 %v1654, %v415
      %v1664 = vmul.f32 %v1655, %v413
      %v1665 = vmul.f32 %v1653, %v433
      %v1666 = vmul.f32 %v1654, %v437
      %v1667 = vmul.f32 %v1655, %v435
      %v1668 = vld [vmem:[#allocation2 + $0x8] sm:$0xff]
      %v1669 = vld [vmem:[#allocation2 + $0x10] sm:$0xff]
      %v1670 = vld [vmem:[#allocation2 + $0x18] sm:$0xff]
      %v1671 = vmul.f32 %v1668, %v458
      %v1672 = vmul.f32 %v1669, %v462
      %v1673 = vmul.f32 %v1670, %v460
      %v1674 = vmul.f32 %v1668, %v480
      %v1675 = vmul.f32 %v1669, %v484
      %v1676 = vmul.f32 %v1670, %v482
      %v1677 = vmul.f32 %v1668, %v502
      %v1678 = vmul.f32 %v1669, %v506
      %v1679 = vmul.f32 %v1670, %v504
      %v1680 = vmul.f32 %v1668, %v524
      %v1681 = vmul.f32 %v1669, %v528
      %v1682 = vmul.f32 %v1670, %v526
      %1686 = vrot.lane.b32.xlu0 %v1659, 127
      %v1687 = vpop.permute.xlu0 %1686
      %1688 = vrot.lane.b32.xlu0 %v1660, 127
      %v1689 = vpop.permute.xlu0 %1688
      %1690 = vrot.lane.b32.xlu0 %v1661, 127
      %v1691 = vpop.permute.xlu0 %1690
      %v1692 = vsel %vm436, %v1687, %v1689
      %v1693 = vsel %vm436, %v1689, %v1691
      %1697 = vrot.lane.b32.xlu0 %v1662, 126
      %v1698 = vpop.permute.xlu0 %1697
      %1699 = vrot.lane.b32.xlu0 %v1663, 126
      %v1700 = vpop.permute.xlu0 %1699
      %1701 = vrot.lane.b32.xlu0 %v1664, 126
      %v1702 = vpop.permute.xlu0 %1701
      %v1703 = vsel %vm555, %v1698, %v1700
      %v1704 = vsel %vm555, %v1700, %v1702
      %1708 = vrot.lane.b32.xlu0 %v1665, 112
      %v1709 = vpop.permute.xlu0 %1708
      %1710 = vrot.lane.b32.xlu0 %v1666, 112
      %v1711 = vpop.permute.xlu0 %1710
      %1712 = vrot.lane.b32.xlu0 %v1667, 112
      %v1713 = vpop.permute.xlu0 %1712
      %v1714 = vsel %vm392, %v1709, %v1711
      %v1715 = vsel %vm392, %v1711, %v1713
      %1718 = vrot.lane.b32.xlu0 %v1654, 111
      %v1719 = vpop.permute.xlu0 %1718
      %1720 = vrot.lane.b32.xlu0 %v1655, 111
      %v1721 = vpop.permute.xlu0 %1720
      %v1722 = vsel %vm370, %v1719, %v1721
      %1726 = vrot.lane.b32.xlu0 %v1671, 110
      %v1727 = vpop.permute.xlu0 %1726
      %1728 = vrot.lane.b32.xlu0 %v1672, 110
      %v1729 = vpop.permute.xlu0 %1728
      %1730 = vrot.lane.b32.xlu0 %v1673, 110
      %v1731 = vpop.permute.xlu0 %1730
      %v1732 = vsel %vm585, %v1727, %v1729
      %v1733 = vsel %vm585, %v1729, %v1731
      %1737 = vrot.lane.b32.xlu0 %v1674, 96
      %v1738 = vpop.permute.xlu0 %1737
      %1739 = vrot.lane.b32.xlu0 %v1675, 96
      %v1740 = vpop.permute.xlu0 %1739
      %1741 = vrot.lane.b32.xlu0 %v1676, 96
      %v1742 = vpop.permute.xlu0 %1741
      %v1743 = vsel %vm597, %v1738, %v1740
      %v1744 = vsel %vm597, %v1740, %v1742
      %1748 = vrot.lane.b32.xlu0 %v1677, 95
      %v1749 = vpop.permute.xlu0 %1748
      %1750 = vrot.lane.b32.xlu0 %v1678, 95
      %v1751 = vpop.permute.xlu0 %1750
      %1752 = vrot.lane.b32.xlu0 %v1679, 95
      %v1753 = vpop.permute.xlu0 %1752
      %v1754 = vsel %vm609, %v1749, %v1751
      %v1755 = vsel %vm609, %v1751, %v1753
      %1759 = vrot.lane.b32.xlu0 %v1680, 94
      %v1760 = vpop.permute.xlu0 %1759
      %1761 = vrot.lane.b32.xlu0 %v1681, 94
      %v1762 = vpop.permute.xlu0 %1761
      %1763 = vrot.lane.b32.xlu0 %v1682, 94
      %v1764 = vpop.permute.xlu0 %1763
      %v1765 = vsel %vm621, %v1760, %v1762
      %v1766 = vsel %vm621, %v1762, %v1764
      %v1767 = vld [vmem:[%s7] sm:$0xff]
      %1771 = vrot.lane.b32.xlu0 %v1656, 17
      %v1772 = vpop.permute.xlu0 %1771
      %1773 = vrot.lane.b32.xlu0 %v1657, 17
      %v1774 = vpop.permute.xlu0 %1773
      %1775 = vrot.lane.b32.xlu0 %v1658, 17
      %v1776 = vpop.permute.xlu0 %1775
      %1777 = vrot.lane.b32.xlu0 %v1692, 17
      %v1778 = vpop.permute.xlu0 %1777
      %1779 = vrot.lane.b32.xlu0 %v1693, 17
      %v1780 = vpop.permute.xlu0 %1779
      %1781 = vrot.lane.b32.xlu0 %v1691, 17
      %v1782 = vpop.permute.xlu0 %1781
      %1783 = vrot.lane.b32.xlu0 %v1703, 17
      %v1784 = vpop.permute.xlu0 %1783
      %1785 = vrot.lane.b32.xlu0 %v1704, 17
      %v1786 = vpop.permute.xlu0 %1785
      %1787 = vrot.lane.b32.xlu0 %v1702, 17
      %v1788 = vpop.permute.xlu0 %1787
      %1789 = vrot.lane.b32.xlu0 %v1714, 17
      %v1790 = vpop.permute.xlu0 %1789
      %1791 = vrot.lane.b32.xlu0 %v1715, 17
      %v1792 = vpop.permute.xlu0 %1791
      %1793 = vrot.lane.b32.xlu0 %v1713, 17
      %v1794 = vpop.permute.xlu0 %1793
      %1795 = vrot.lane.b32.xlu0 %v1719, 17
      %v1796 = vpop.permute.xlu0 %1795
      %1797 = vrot.lane.b32.xlu0 %v1722, 17
      %v1798 = vpop.permute.xlu0 %1797
      %1799 = vrot.lane.b32.xlu0 %v1721, 17
      %v1800 = vpop.permute.xlu0 %1799
      %1801 = vrot.lane.b32.xlu0 %v1727, 17
      %v1802 = vpop.permute.xlu0 %1801
      %1803 = vrot.lane.b32.xlu0 %v1732, 17
      %v1804 = vpop.permute.xlu0 %1803
      %1805 = vrot.lane.b32.xlu0 %v1733, 17
      %v1806 = vpop.permute.xlu0 %1805
      %1807 = vrot.lane.b32.xlu0 %v1738, 17
      %v1808 = vpop.permute.xlu0 %1807
      %1809 = vrot.lane.b32.xlu0 %v1743, 17
      %v1810 = vpop.permute.xlu0 %1809
      %1811 = vrot.lane.b32.xlu0 %v1744, 17
      %v1812 = vpop.permute.xlu0 %1811
      %1813 = vrot.lane.b32.xlu0 %v1749, 17
      %v1814 = vpop.permute.xlu0 %1813
      %1815 = vrot.lane.b32.xlu0 %v1754, 17
      %v1816 = vpop.permute.xlu0 %1815
      %1817 = vrot.lane.b32.xlu0 %v1755, 17
      %v1818 = vpop.permute.xlu0 %1817
      %1819 = vrot.lane.b32.xlu0 %v1760, 17
      %v1820 = vpop.permute.xlu0 %1819
      %1821 = vrot.lane.b32.xlu0 %v1765, 17
      %v1822 = vpop.permute.xlu0 %1821
      %1823 = vrot.lane.b32.xlu0 %v1766, 17
      %v1824 = vpop.permute.xlu0 %1823
      %v1825 = vsel %vm527, %v1772, %v1774
      %v1826 = vsel %vm527, %v1774, %v1776
      %v1827 = vsel %vm527, %v1778, %v1780
      %v1828 = vsel %vm527, %v1780, %v1782
      %v1829 = vsel %vm527, %v1784, %v1786
      %v1830 = vsel %vm527, %v1786, %v1788
      %v1831 = vsel %vm527, %v1790, %v1792
      %v1832 = vsel %vm527, %v1792, %v1794
      %v1833 = vsel %vm527, %v1796, %v1798
      %v1834 = vsel %vm527, %v1798, %v1800
      %v1835 = vsel %vm527, %v1802, %v1804
      %v1836 = vsel %vm527, %v1804, %v1806
      %v1837 = vsel %vm527, %v1808, %v1810
      %v1838 = vsel %vm527, %v1810, %v1812
      %v1839 = vsel %vm527, %v1814, %v1816
      %v1840 = vsel %vm527, %v1816, %v1818
      %v1841 = vsel %vm527, %v1820, %v1822
      %v1842 = vsel %vm527, %v1822, %v1824
      %v1862 = vsel %vm718, %v1767, 0
      %1864 = vmatprep.subr.mxu0 0.0
      %1865 = vmatpush1.msra.mxu0 0.0
      %1866 = vmatprep.subr.mxu0 0.0
      %1867 = vmatpush1.msra.mxu0 0.0
      %1868 = vmatprep.subr.mxu0 0.0
      %1869 = vmatpush1.msra.mxu0 0.0
      %1870 = vmatprep.subr.mxu0 0.0
      %1871 = vmatpush1.msra.mxu0 0.0
      %1872 = vmatprep.subr.mxu0 0.0
      %1873 = vmatpush1.msra.mxu0 0.0
      %1874 = vmatprep.subr.mxu0 0.0
      %1875 = vmatpush1.msra.mxu0 0.0
      %1876 = vmatprep.subr.mxu0 0.0
      %1877 = vmatpush1.msra.mxu0 0.0
      %1878 = vmatprep.subr.mxu0 %v1842
      %1879 = vmatpush1.msra.mxu0 %v1841
      %1880 = vmatprep.subr.mxu0 %v1840
      %1881 = vmatpush1.msra.mxu0 %v1839
      %1882 = vmatprep.subr.mxu0 %v1838
      %1883 = vmatpush1.msra.mxu0 %v1837
      %1884 = vmatprep.subr.mxu0 %v1836
      %1885 = vmatpush1.msra.mxu0 %v1835
      %1886 = vmatprep.subr.mxu0 %v1834
      %1887 = vmatpush1.msra.mxu0 %v1833
      %1888 = vmatprep.subr.mxu0 %v1832
      %1889 = vmatpush1.msra.mxu0 %v1831
      %1890 = vmatprep.subr.mxu0 %v1830
      %1891 = vmatpush1.msra.mxu0 %v1829
      %1892 = vmatprep.subr.mxu0 %v1828
      %1893 = vmatpush1.msra.mxu0 %v1827
      %1894 = vmatprep.subr.mxu0 %v1826
      %1895 = vmatpush1.msra.mxu0 %v1825
      %1896 = vmatprep.subr.mxu0 0.0
      %1897 = vmatpush2.msra.mxu0 0.0
      %1898 = vmatprep.subr.mxu0 0.0
      %1899 = vmatpush2.msra.mxu0 0.0
      %1900 = vmatprep.subr.mxu0 0.0
      %1901 = vmatpush2.msra.mxu0 0.0
      %1902 = vmatprep.subr.mxu0 0.0
      %1903 = vmatpush2.msra.mxu0 0.0
      %1904 = vmatprep.subr.mxu0 0.0
      %1905 = vmatpush2.msra.mxu0 0.0
      %1906 = vmatprep.subr.mxu0 0.0
      %1907 = vmatpush2.msra.mxu0 0.0
      %1908 = vmatprep.subr.mxu0 0.0
      %1909 = vmatpush2.msra.mxu0 0.0
      %1910 = vmatprep.subr.mxu0 0.0
      %1911 = vmatpush2.msra.mxu0 0.0
      %1912 = vmatprep.subr.mxu0 0.0
      %1913 = vmatpush2.msra.mxu0 0.0
      %1914 = vmatprep.subr.mxu0 0.0
      %1915 = vmatpush2.msra.mxu0 0.0
      %1916 = vmatprep.subr.mxu0 0.0
      %1917 = vmatpush2.msra.mxu0 0.0
      %1918 = vmatprep.subr.mxu0 0.0
      %1919 = vmatpush2.msra.mxu0 0.0
      %1920 = vmatprep.subr.mxu0 0.0
      %1921 = vmatpush2.msra.mxu0 0.0
      %1922 = vmatprep.subr.mxu0 0.0
      %1923 = vmatpush2.msra.mxu0 0.0
      %1924 = vmatprep.subr.mxu0 0.0
      %1925 = vmatpush2.msra.mxu0 0.0
      %1926 = vmatprep.subr.mxu0 0.0
      %1927 = vmatpush2.msra.mxu0 0.0
      %1928 = vmatprep.mubr.f32.mxu0 0.0
      %1929 = vmatmul.mubr.f32.gmra.mxu0 %v1862
      %v1930 = vpop.f32.mrf.mxu0
      %v1931 = vadd.f32 0.0, %v1930
      %v1932 = vpop.f32.mrf.mxu0
      %v1933 = vadd.f32 0.0, %v1932
      %1934 = vdwg.mxu0
      %v1935 = vadd.f32 %v1363, %v1931
      %v1936 = vadd.f32 %v1364, %v1933
      %v1937 = vadd.f32 %v1935, %v789
      %v1938 = vadd.f32 %v1936, %v791
      %1939 = vst [vmem:[#allocation2 + $0x8] sm:$0xff] %v1937
      %1940 = vst [vmem:[#allocation2 + $0x10] sm:$0xff] %v1938
      %v1941 = vld [vmem:[#allocation2] sm:$0xff]
      %v1942 = vld [vmem:[#allocation2 + $0x8] sm:$0xff]
      %v1943 = vld [vmem:[#allocation2 + $0x10] sm:$0xff]
      %v1944 = vmul.f32 %v1941, %v367
      %v1945 = vmul.f32 %v1942, %v371
      %v1946 = vmul.f32 %v1943, %v369
      %v1947 = vmul.f32 %v1941, %v389
      %v1948 = vmul.f32 %v1942, %v393
      %v1949 = vmul.f32 %v1943, %v391
      %v1950 = vmul.f32 %v1941, %v411
      %v1951 = vmul.f32 %v1942, %v415
      %v1952 = vmul.f32 %v1943, %v413
      %v1953 = vmul.f32 %v1941, %v433
      %v1954 = vmul.f32 %v1942, %v437
      %v1955 = vmul.f32 %v1943, %v435
      %v1956 = vld [vmem:[#allocation2 + $0x8] sm:$0xff]
      %v1957 = vld [vmem:[#allocation2 + $0x10] sm:$0xff]
      %v1958 = vld [vmem:[#allocation2 + $0x18] sm:$0xff]
      %v1959 = vmul.f32 %v1956, %v458
      %v1960 = vmul.f32 %v1957, %v462
      %v1961 = vmul.f32 %v1958, %v460
      %v1962 = vmul.f32 %v1956, %v480
      %v1963 = vmul.f32 %v1957, %v484
      %v1964 = vmul.f32 %v1958, %v482
      %v1965 = vmul.f32 %v1956, %v502
      %v1966 = vmul.f32 %v1957, %v506
      %v1967 = vmul.f32 %v1958, %v504
      %v1968 = vmul.f32 %v1956, %v524
      %v1969 = vmul.f32 %v1957, %v528
      %v1970 = vmul.f32 %v1958, %v526
      %1974 = vrot.lane.b32.xlu0 %v1947, 127
      %v1975 = vpop.permute.xlu0 %1974
      %1976 = vrot.lane.b32.xlu0 %v1948, 127
      %v1977 = vpop.permute.xlu0 %1976
      %1978 = vrot.lane.b32.xlu0 %v1949, 127
      %v1979 = vpop.permute.xlu0 %1978
      %v1980 = vsel %vm436, %v1975, %v1977
      %v1981 = vsel %vm436, %v1977, %v1979
      %1985 = vrot.lane.b32.xlu0 %v1950, 126
      %v1986 = vpop.permute.xlu0 %1985
      %1987 = vrot.lane.b32.xlu0 %v1951, 126
      %v1988 = vpop.permute.xlu0 %1987
      %1989 = vrot.lane.b32.xlu0 %v1952, 126
      %v1990 = vpop.permute.xlu0 %1989
      %v1991 = vsel %vm555, %v1986, %v1988
      %v1992 = vsel %vm555, %v1988, %v1990
      %1996 = vrot.lane.b32.xlu0 %v1953, 112
      %v1997 = vpop.permute.xlu0 %1996
      %1998 = vrot.lane.b32.xlu0 %v1954, 112
      %v1999 = vpop.permute.xlu0 %1998
      %2000 = vrot.lane.b32.xlu0 %v1955, 112
      %v2001 = vpop.permute.xlu0 %2000
      %v2002 = vsel %vm392, %v1997, %v1999
      %v2003 = vsel %vm392, %v1999, %v2001
      %2006 = vrot.lane.b32.xlu0 %v1942, 111
      %v2007 = vpop.permute.xlu0 %2006
      %2008 = vrot.lane.b32.xlu0 %v1943, 111
      %v2009 = vpop.permute.xlu0 %2008
      %v2010 = vsel %vm370, %v2007, %v2009
      %2014 = vrot.lane.b32.xlu0 %v1959, 110
      %v2015 = vpop.permute.xlu0 %2014
      %2016 = vrot.lane.b32.xlu0 %v1960, 110
      %v2017 = vpop.permute.xlu0 %2016
      %2018 = vrot.lane.b32.xlu0 %v1961, 110
      %v2019 = vpop.permute.xlu0 %2018
      %v2020 = vsel %vm585, %v2015, %v2017
      %v2021 = vsel %vm585, %v2017, %v2019
      %2025 = vrot.lane.b32.xlu0 %v1962, 96
      %v2026 = vpop.permute.xlu0 %2025
      %2027 = vrot.lane.b32.xlu0 %v1963, 96
      %v2028 = vpop.permute.xlu0 %2027
      %2029 = vrot.lane.b32.xlu0 %v1964, 96
      %v2030 = vpop.permute.xlu0 %2029
      %v2031 = vsel %vm597, %v2026, %v2028
      %v2032 = vsel %vm597, %v2028, %v2030
      %2036 = vrot.lane.b32.xlu0 %v1965, 95
      %v2037 = vpop.permute.xlu0 %2036
      %2038 = vrot.lane.b32.xlu0 %v1966, 95
      %v2039 = vpop.permute.xlu0 %2038
      %2040 = vrot.lane.b32.xlu0 %v1967, 95
      %v2041 = vpop.permute.xlu0 %2040
      %v2042 = vsel %vm609, %v2037, %v2039
      %v2043 = vsel %vm609, %v2039, %v2041
      %2047 = vrot.lane.b32.xlu0 %v1968, 94
      %v2048 = vpop.permute.xlu0 %2047
      %2049 = vrot.lane.b32.xlu0 %v1969, 94
      %v2050 = vpop.permute.xlu0 %2049
      %2051 = vrot.lane.b32.xlu0 %v1970, 94
      %v2052 = vpop.permute.xlu0 %2051
      %v2053 = vsel %vm621, %v2048, %v2050
      %v2054 = vsel %vm621, %v2050, %v2052
      %v2055 = vld [vmem:[%s8] sm:$0x7]
      %2059 = vrot.lane.b32.xlu0 %v1944, 17
      %v2060 = vpop.permute.xlu0 %2059
      %2061 = vrot.lane.b32.xlu0 %v1945, 17
      %v2062 = vpop.permute.xlu0 %2061
      %2063 = vrot.lane.b32.xlu0 %v1946, 17
      %v2064 = vpop.permute.xlu0 %2063
      %2065 = vrot.lane.b32.xlu0 %v1980, 17
      %v2066 = vpop.permute.xlu0 %2065
      %2067 = vrot.lane.b32.xlu0 %v1981, 17
      %v2068 = vpop.permute.xlu0 %2067
      %2069 = vrot.lane.b32.xlu0 %v1979, 17
      %v2070 = vpop.permute.xlu0 %2069
      %2071 = vrot.lane.b32.xlu0 %v1991, 17
      %v2072 = vpop.permute.xlu0 %2071
      %2073 = vrot.lane.b32.xlu0 %v1992, 17
      %v2074 = vpop.permute.xlu0 %2073
      %2075 = vrot.lane.b32.xlu0 %v1990, 17
      %v2076 = vpop.permute.xlu0 %2075
      %2077 = vrot.lane.b32.xlu0 %v2002, 17
      %v2078 = vpop.permute.xlu0 %2077
      %2079 = vrot.lane.b32.xlu0 %v2003, 17
      %v2080 = vpop.permute.xlu0 %2079
      %2081 = vrot.lane.b32.xlu0 %v2001, 17
      %v2082 = vpop.permute.xlu0 %2081
      %2083 = vrot.lane.b32.xlu0 %v2007, 17
      %v2084 = vpop.permute.xlu0 %2083
      %2085 = vrot.lane.b32.xlu0 %v2010, 17
      %v2086 = vpop.permute.xlu0 %2085
      %2087 = vrot.lane.b32.xlu0 %v2009, 17
      %v2088 = vpop.permute.xlu0 %2087
      %2089 = vrot.lane.b32.xlu0 %v2015, 17
      %v2090 = vpop.permute.xlu0 %2089
      %2091 = vrot.lane.b32.xlu0 %v2020, 17
      %v2092 = vpop.permute.xlu0 %2091
      %2093 = vrot.lane.b32.xlu0 %v2021, 17
      %v2094 = vpop.permute.xlu0 %2093
      %2095 = vrot.lane.b32.xlu0 %v2026, 17
      %v2096 = vpop.permute.xlu0 %2095
      %2097 = vrot.lane.b32.xlu0 %v2031, 17
      %v2098 = vpop.permute.xlu0 %2097
      %2099 = vrot.lane.b32.xlu0 %v2032, 17
      %v2100 = vpop.permute.xlu0 %2099
      %2101 = vrot.lane.b32.xlu0 %v2037, 17
      %v2102 = vpop.permute.xlu0 %2101
      %2103 = vrot.lane.b32.xlu0 %v2042, 17
      %v2104 = vpop.permute.xlu0 %2103
      %2105 = vrot.lane.b32.xlu0 %v2043, 17
      %v2106 = vpop.permute.xlu0 %2105
      %2107 = vrot.lane.b32.xlu0 %v2048, 17
      %v2108 = vpop.permute.xlu0 %2107
      %2109 = vrot.lane.b32.xlu0 %v2053, 17
      %v2110 = vpop.permute.xlu0 %2109
      %2111 = vrot.lane.b32.xlu0 %v2054, 17
      %v2112 = vpop.permute.xlu0 %2111
      %v2113 = vsel %vm527, %v2060, %v2062
      %v2114 = vsel %vm527, %v2062, %v2064
      %v2115 = vsel %vm527, %v2066, %v2068
      %v2116 = vsel %vm527, %v2068, %v2070
      %v2117 = vsel %vm527, %v2072, %v2074
      %v2118 = vsel %vm527, %v2074, %v2076
      %v2119 = vsel %vm527, %v2078, %v2080
      %v2120 = vsel %vm527, %v2080, %v2082
      %v2121 = vsel %vm527, %v2084, %v2086
      %v2122 = vsel %vm527, %v2086, %v2088
      %v2123 = vsel %vm527, %v2090, %v2092
      %v2124 = vsel %vm527, %v2092, %v2094
      %v2125 = vsel %vm527, %v2096, %v2098
      %v2126 = vsel %vm527, %v2098, %v2100
      %v2127 = vsel %vm527, %v2102, %v2104
      %v2128 = vsel %vm527, %v2104, %v2106
      %v2129 = vsel %vm527, %v2108, %v2110
      %v2130 = vsel %vm527, %v2110, %v2112
      %v2150 = vsel %vm718, %v2055, 0
      %2152 = vmatprep.subr.mxu0 0.0
      %2153 = vmatpush1.msra.mxu0 0.0
      %2154 = vmatprep.subr.mxu0 0.0
      %2155 = vmatpush1.msra.mxu0 0.0
      %2156 = vmatprep.subr.mxu0 0.0
      %2157 = vmatpush1.msra.mxu0 0.0
      %2158 = vmatprep.subr.mxu0 0.0
      %2159 = vmatpush1.msra.mxu0 0.0
      %2160 = vmatprep.subr.mxu0 0.0
      %2161 = vmatpush1.msra.mxu0 0.0
      %2162 = vmatprep.subr.mxu0 0.0
      %2163 = vmatpush1.msra.mxu0 0.0
      %2164 = vmatprep.subr.mxu0 0.0
      %2165 = vmatpush1.msra.mxu0 0.0
      %2166 = vmatprep.subr.mxu0 %v2130
      %2167 = vmatpush1.msra.mxu0 %v2129
      %2168 = vmatprep.subr.mxu0 %v2128
      %2169 = vmatpush1.msra.mxu0 %v2127
      %2170 = vmatprep.subr.mxu0 %v2126
      %2171 = vmatpush1.msra.mxu0 %v2125
      %2172 = vmatprep.subr.mxu0 %v2124
      %2173 = vmatpush1.msra.mxu0 %v2123
      %2174 = vmatprep.subr.mxu0 %v2122
      %2175 = vmatpush1.msra.mxu0 %v2121
      %2176 = vmatprep.subr.mxu0 %v2120
      %2177 = vmatpush1.msra.mxu0 %v2119
      %2178 = vmatprep.subr.mxu0 %v2118
      %2179 = vmatpush1.msra.mxu0 %v2117
      %2180 = vmatprep.subr.mxu0 %v2116
      %2181 = vmatpush1.msra.mxu0 %v2115
      %2182 = vmatprep.subr.mxu0 %v2114
      %2183 = vmatpush1.msra.mxu0 %v2113
      %2184 = vmatprep.subr.mxu0 0.0
      %2185 = vmatpush2.msra.mxu0 0.0
      %2186 = vmatprep.subr.mxu0 0.0
      %2187 = vmatpush2.msra.mxu0 0.0
      %2188 = vmatprep.subr.mxu0 0.0
      %2189 = vmatpush2.msra.mxu0 0.0
      %2190 = vmatprep.subr.mxu0 0.0
      %2191 = vmatpush2.msra.mxu0 0.0
      %2192 = vmatprep.subr.mxu0 0.0
      %2193 = vmatpush2.msra.mxu0 0.0
      %2194 = vmatprep.subr.mxu0 0.0
      %2195 = vmatpush2.msra.mxu0 0.0
      %2196 = vmatprep.subr.mxu0 0.0
      %2197 = vmatpush2.msra.mxu0 0.0
      %2198 = vmatprep.subr.mxu0 0.0
      %2199 = vmatpush2.msra.mxu0 0.0
      %2200 = vmatprep.subr.mxu0 0.0
      %2201 = vmatpush2.msra.mxu0 0.0
      %2202 = vmatprep.subr.mxu0 0.0
      %2203 = vmatpush2.msra.mxu0 0.0
      %2204 = vmatprep.subr.mxu0 0.0
      %2205 = vmatpush2.msra.mxu0 0.0
      %2206 = vmatprep.subr.mxu0 0.0
      %2207 = vmatpush2.msra.mxu0 0.0
      %2208 = vmatprep.subr.mxu0 0.0
      %2209 = vmatpush2.msra.mxu0 0.0
      %2210 = vmatprep.subr.mxu0 0.0
      %2211 = vmatpush2.msra.mxu0 0.0
      %2212 = vmatprep.subr.mxu0 0.0
      %2213 = vmatpush2.msra.mxu0 0.0
      %2214 = vmatprep.subr.mxu0 0.0
      %2215 = vmatpush2.msra.mxu0 0.0
      %2216 = vmatprep.mubr.f32.mxu0 0.0
      %2217 = vmatmul.mubr.f32.gmra.mxu0 %v2150
      %v2218 = vpop.f32.mrf.mxu0
      %v2219 = vadd.f32 %v347, %v2218
      %v2220 = vpop.f32.mrf.mxu0
      %v2221 = vadd.f32 %v347, %v2220
      %2222 = vdwg.mxu0
      %v2225 = vcombine.low %v2219, %v2221
      %2227 = vst [vmem:[%s332] sm:$0x77] %v2225
      %p2228 = scmp.lt.s32.totalorder %s20, 1
      %s2229 = scalar_select %p2228, %s20, 1
      %s2230 = smul.addr %s2229, 2
      %s2231 = smul.addr %s2230, 4
      %s2232 = scalar_lea.vmem %s9, %s2231
      // Predicated region
      $region57: #{edsr_gated_forward.1} parent=55 // pred_check
        %p2233 = pneg %p232
      $region58: #{edsr_gated_forward.1} parent=55 // pred_check_branch
        %2235 = sbr.rel (%p2233) target = $region60
      $region59: #{edsr_gated_forward.1} parent=55 // pred_region
        _
      $region60: #{edsr_gated_forward.1} parent=55 // pred_fallthru
        _
    $region56: #{edsr_gated_forward.1} parent=5 // pred_fallthru
      _
    %p2236 = scmp.le.s32.totalorder 2, %s15
    // Predicated region
    $region61: #{edsr_gated_forward.1} parent=5 // pred_check
      %p2237 = pneg %p2236
    $region62: #{edsr_gated_forward.1} parent=5 // pred_check_branch
      %2239 = sbr.rel (%p2237) target = $region64
    $region63: #{edsr_gated_forward.1} parent=5 // pred_region
      %s2240 = ssub.s32 %s15, 2
      // Predicated region
      $region65: #{edsr_gated_forward.1} parent=63 // pred_check
        %p2241 = pneg %p238
      $region66: #{edsr_gated_forward.1} parent=63 // pred_check_branch
        %2243 = sbr.rel (%p2241) target = $region68
      $region67: #{edsr_gated_forward.1} parent=63 // pred_region
        %p2244 = scmp.lt.s32.totalorder %s21, 1
        %s2245 = scalar_select %p2244, %s21, 1
        %s2246 = smul.addr %s2245, 2
        %s2247 = smul.addr %s2246, 4
        %s2248 = scalar_lea.vmem %s9, %s2247
      $region68: #{edsr_gated_forward.1} parent=63 // pred_fallthru
        _
    $region64: #{edsr_gated_forward.1} parent=5 // pred_fallthru
      _
  $region6: #{edsr_gated_forward.1} parent=0 // loop_footer
    %s19 = sadd.s32 1, %s15
  $region7: #{edsr_gated_forward.1} parent=0 // loop_footer_branch
    %14 = sbr.rel target = $region3
  $region8: #{edsr_gated_forward.1} parent=0 // loop_exit
    _

</llo_original>
